<compile_context>
chip_gen: v7x
topology: tpu7x:2x2x1
jax: 0.10.0
libtpu: 0.0.40
codegen_flags: <defaults>
</compile_context>

<pallas_src>
import jax
import jax.numpy as jnp
from jax.experimental import pallas as pl
from jax.experimental.pallas import tpu as pltpu

INPUT_DIM = 1
HIDDEN = 32
NUM_LAYERS = 2  # hard-wired: two stacked layers in the kernel


def rnn_kernel(x_ref, hinit_ref,
               wih0_ref, whh0_ref, b0_ref,
               w1_ref, b1_ref,
               wout_ref, bout_ref,
               y_ref, hout_ref):
    seq = x_ref.shape[0]

    # Load constant weights once; they stay resident across the unrolled loop.
    wih0 = wih0_ref[...]          # (1, H)   layer-0 input weights (in_dim == 1)
    whh0 = whh0_ref[...]          # (H, H)   layer-0 recurrent weights (transposed)
    b0 = b0_ref[...]              # (1, H)   b_ih0 + b_hh0
    w1 = w1_ref[...]              # (2H, H)  [W_ih1^T ; W_hh1^T] stacked
    b1 = b1_ref[...]              # (1, H)   b_ih1 + b_hh1
    wout = wout_ref[...]          # (1, H)   output head weights (row)
    bout = bout_ref[0, 0]         # scalar output bias (SMEM)

    h0 = hinit_ref[0]             # (B, H)
    h1 = hinit_ref[1]             # (B, H)

    # seq is small and static: fully unrolled straight-line time loop, hidden
    # state carried in vregs.
    h1_hist = []
    for t in range(seq):
        x_t = x_ref[t]            # (B, 1), static index -> static slice
        # Layer 0: K=1 input projection as a VPU broadcast multiply; one MXU
        # dot for the hidden recurrence.
        h0 = jnp.maximum(
            x_t * wih0
            + jnp.dot(h0, whh0, preferred_element_type=jnp.float32)
            + b0,
            0.0)
        # Layer 1: single fused K=2H matmul instead of two K=H matmuls.
        h01 = jnp.concatenate([h0, h1], axis=-1)             # (B, 2H)
        h1 = jnp.maximum(
            jnp.dot(h01, w1, preferred_element_type=jnp.float32) + b1,
            0.0)
        h1_hist.append(h1)

    # Deferred output head: one VPU multiply + lane reduce over the whole h1
    # history, then a single store of the (seq, B) slab.
    hist = jnp.stack(h1_hist, axis=0)                        # (seq, B, H)
    y = jnp.sum(hist * wout, axis=-1) + bout                 # (seq, B)
    y_ref[...] = y.astype(y_ref.dtype)

    # Final hidden state after the last step.
    hout_ref[0] = h0.astype(hout_ref.dtype)
    hout_ref[1] = h1.astype(hout_ref.dtype)


def rnn_demo_forward(x, h, params):
    """x: (seq, batch, input_dim) f32; h: (num_layers, batch, hidden) f32."""
    seq, batch, in_dim = x.shape
    hidden = params["w_hh0"].shape[0]

    # Glue: pre-transpose weights so the kernel does plain (B,K)@(K,N) dots,
    # fold paired bias vectors, and stack layer-1's two weights so its two
    # matmuls fuse into one K=2H MXU pass.
    wih0_t = params["w_ih0"].T.reshape(1, hidden)            # (1, hidden)
    whh0_t = params["w_hh0"].T                               # (hidden, hidden)
    b0 = (params["b_ih0"] + params["b_hh0"]).reshape(1, hidden)
    w1_stacked = jnp.concatenate(
        [params["w_ih1"].T, params["w_hh1"].T], axis=0)      # (2*hidden, hidden)
    b1 = (params["b_ih1"] + params["b_hh1"]).reshape(1, hidden)
    wout_row = params["w_out"].reshape(1, hidden)            # (1, hidden)
    bout = params["b_out"].reshape(1, 1)                     # (1, 1) -> SMEM scalar

    full = lambda shape: pl.BlockSpec(shape, lambda i, _s=shape: (0,) * len(_s))
    grid_spec = pltpu.PrefetchScalarGridSpec(
        num_scalar_prefetch=0,
        grid=(1,),                                           # whole sequence in one step
        in_specs=[
            full((seq, batch, in_dim)),                      # x (full sequence)
            full((NUM_LAYERS, batch, hidden)),               # h init
            full((1, hidden)),                               # W_ih0^T (row)
            full((hidden, hidden)),                          # W_hh0^T
            full((1, hidden)),                               # b0
            full((2 * hidden, hidden)),                      # [W_ih1^T ; W_hh1^T]
            full((1, hidden)),                               # b1
            full((1, hidden)),                               # W_out (row)
            pl.BlockSpec(memory_space=pltpu.MemorySpace.SMEM),  # b_out scalar
        ],
        out_specs=[
            full((seq, batch)),                              # y slab, stored once
            full((NUM_LAYERS, batch, hidden)),               # h_state
        ],
    )

    y2d, h_state = pl.pallas_call(
        rnn_kernel,
        out_shape=(
            jax.ShapeDtypeStruct((seq, batch), jnp.float32),
            jax.ShapeDtypeStruct((NUM_LAYERS, batch, hidden), jnp.float32),
        ),
        grid_spec=grid_spec,
        compiler_params=pltpu.CompilerParams(
            dimension_semantics=("arbitrary",)),             # time recurrence, not parallel
    )(x, h, wih0_t, whh0_t, b0, w1_stacked, b1, wout_row, bout)

    # Reshape the lane-packed (seq, batch) slab to the module's (seq, batch, 1).
    return y2d[:, :, None], h_state


def ref_forward(x, h, p):
    """Pure-JAX reference mirroring torch.nn.RNN(relu, 2 layers) + Linear."""
    hs0, hs1 = h[0], h[1]
    ys = []
    for t in range(x.shape[0]):
        hs0 = jax.nn.relu(x[t] @ p["w_ih0"].T + p["b_ih0"]
                          + hs0 @ p["w_hh0"].T + p["b_hh0"])
        hs1 = jax.nn.relu(hs0 @ p["w_ih1"].T + p["b_ih1"]
                          + hs1 @ p["w_hh1"].T + p["b_hh1"])
        ys.append(hs1 @ p["w_out"].T + p["b_out"])
    return jnp.stack(ys, axis=0), jnp.stack([hs0, hs1], axis=0)


def init_params(key, input_dim, hidden):
    # Deterministic init matching PyTorch's U(-1/sqrt(H), 1/sqrt(H)) convention.
    k = 1.0 / jnp.sqrt(hidden)
    names_shapes = [
        ("w_ih0", (hidden, input_dim)), ("w_hh0", (hidden, hidden)),
        ("b_ih0", (hidden,)), ("b_hh0", (hidden,)),
        ("w_ih1", (hidden, hidden)), ("w_hh1", (hidden, hidden)),
        ("b_ih1", (hidden,)), ("b_hh1", (hidden,)),
        ("w_out", (1, hidden)), ("b_out", (1,)),
    ]
    keys = jax.random.split(key, len(names_shapes))
    return {n: jax.random.uniform(kk, s, jnp.float32, -k, k)
            for kk, (n, s) in zip(keys, names_shapes)}


if __name__ == "__main__":
    seq, batch = 8, 2
    key = jax.random.PRNGKey(0)
    kp, kx = jax.random.split(key)
    params = init_params(kp, INPUT_DIM, HIDDEN)
    x = jax.random.normal(kx, (seq, batch, INPUT_DIM), jnp.float32)
    h0 = jnp.zeros((NUM_LAYERS, batch, HIDDEN), jnp.float32)  # h_state=None -> zeros

    y, h_state = rnn_demo_forward(x, h0, params)
    jax.block_until_ready((y, h_state))

    y_ref, h_ref = ref_forward(x, h0, params)
    assert y.shape == (seq, batch, 1) and h_state.shape == (NUM_LAYERS, batch, HIDDEN)
    assert jnp.allclose(y, y_ref, rtol=1e-2, atol=1e-2)
    assert jnp.allclose(h_state, h_ref, rtol=1e-2, atol=1e-2)
    print("KERNEL_OK")
</pallas_src>

<mosaic_0001>
module attributes {stable_mosaic.version = 11 : i64} {
  func.func @rnn_kernel(%arg0: i32, %arg1: memref<8x2x1xf32, #tpu.memory_space<vmem>>, %arg2: memref<2x2x32xf32, #tpu.memory_space<vmem>>, %arg3: memref<1x32xf32, #tpu.memory_space<vmem>>, %arg4: memref<32x32xf32, #tpu.memory_space<vmem>>, %arg5: memref<1x32xf32, #tpu.memory_space<vmem>>, %arg6: memref<64x32xf32, #tpu.memory_space<vmem>>, %arg7: memref<1x32xf32, #tpu.memory_space<vmem>>, %arg8: memref<1x32xf32, #tpu.memory_space<vmem>>, %arg9: memref<1x1xf32, #tpu.memory_space<smem>>, %arg10: memref<8x2xf32, #tpu.memory_space<vmem>>, %arg11: memref<2x2x32xf32, #tpu.memory_space<vmem>>) attributes {dimension_semantics = [#tpu.dimension_semantics<arbitrary>], iteration_bounds = array<i64: 1>, scalar_prefetch = 0 : i64, scratch_operands = 0 : i64, tpu.core_type = #tpu.core_type<tc>, window_params = [{pipeline_mode = #tpu.pipeline_mode<synchronous>, transform_indices = @transform_0, window_bounds = array<i64: 8, 2, 1>}, {pipeline_mode = #tpu.pipeline_mode<synchronous>, transform_indices = @transform_1, window_bounds = array<i64: 2, 2, 32>}, {pipeline_mode = #tpu.pipeline_mode<synchronous>, transform_indices = @transform_2, window_bounds = array<i64: 1, 32>}, {pipeline_mode = #tpu.pipeline_mode<synchronous>, transform_indices = @transform_3, window_bounds = array<i64: 32, 32>}, {pipeline_mode = #tpu.pipeline_mode<synchronous>, transform_indices = @transform_4, window_bounds = array<i64: 1, 32>}, {pipeline_mode = #tpu.pipeline_mode<synchronous>, transform_indices = @transform_5, window_bounds = array<i64: 64, 32>}, {pipeline_mode = #tpu.pipeline_mode<synchronous>, transform_indices = @transform_6, window_bounds = array<i64: 1, 32>}, {pipeline_mode = #tpu.pipeline_mode<synchronous>, transform_indices = @transform_7, window_bounds = array<i64: 1, 32>}, {transform_indices = @transform_8, window_bounds = array<i64: 1, 1>}, {pipeline_mode = #tpu.pipeline_mode<synchronous>, transform_indices = @transform_9, window_bounds = array<i64: 8, 2>}, {pipeline_mode = #tpu.pipeline_mode<synchronous>, transform_indices = @transform_10, window_bounds = array<i64: 2, 2, 32>}]} {
    %c0 = arith.constant 0 : index
    %c0_0 = arith.constant 0 : index
    %0 = vector.load %arg3[%c0, %c0_0] : memref<1x32xf32, #tpu.memory_space<vmem>>, vector<1x32xf32>
    %c0_1 = arith.constant 0 : index
    %c0_2 = arith.constant 0 : index
    %1 = vector.load %arg4[%c0_1, %c0_2] : memref<32x32xf32, #tpu.memory_space<vmem>>, vector<32x32xf32>
    %c0_3 = arith.constant 0 : index
    %c0_4 = arith.constant 0 : index
    %2 = vector.load %arg5[%c0_3, %c0_4] : memref<1x32xf32, #tpu.memory_space<vmem>>, vector<1x32xf32>
    %c0_5 = arith.constant 0 : index
    %c0_6 = arith.constant 0 : index
    %3 = vector.load %arg6[%c0_5, %c0_6] : memref<64x32xf32, #tpu.memory_space<vmem>>, vector<64x32xf32>
    %c0_7 = arith.constant 0 : index
    %c0_8 = arith.constant 0 : index
    %4 = vector.load %arg7[%c0_7, %c0_8] : memref<1x32xf32, #tpu.memory_space<vmem>>, vector<1x32xf32>
    %c0_9 = arith.constant 0 : index
    %c0_10 = arith.constant 0 : index
    %5 = vector.load %arg8[%c0_9, %c0_10] : memref<1x32xf32, #tpu.memory_space<vmem>>, vector<1x32xf32>
    %c0_11 = arith.constant 0 : index
    %c0_12 = arith.constant 0 : index
    %6 = memref.load %arg9[%c0_11, %c0_12] : memref<1x1xf32, #tpu.memory_space<smem>>
    %c0_13 = arith.constant 0 : index
    %c0_14 = arith.constant 0 : index
    %c0_15 = arith.constant 0 : index
    %7 = vector.load %arg2[%c0_13, %c0_14, %c0_15] : memref<2x2x32xf32, #tpu.memory_space<vmem>>, vector<1x2x32xf32>
    %8 = vector.shape_cast %7 : vector<1x2x32xf32> to vector<2x32xf32>
    %c1 = arith.constant 1 : index
    %c0_16 = arith.constant 0 : index
    %c0_17 = arith.constant 0 : index
    %9 = vector.load %arg2[%c1, %c0_16, %c0_17] : memref<2x2x32xf32, #tpu.memory_space<vmem>>, vector<1x2x32xf32>
    %10 = vector.shape_cast %9 : vector<1x2x32xf32> to vector<2x32xf32>
    %c0_18 = arith.constant 0 : index
    %c0_19 = arith.constant 0 : index
    %c0_20 = arith.constant 0 : index
    %11 = vector.load %arg1[%c0_18, %c0_19, %c0_20] : memref<8x2x1xf32, #tpu.memory_space<vmem>>, vector<1x2x1xf32>
    %12 = vector.shape_cast %11 : vector<1x2x1xf32> to vector<2x1xf32>
    %13 = vector.broadcast %12 : vector<2x1xf32> to vector<2x32xf32>
    %14 = vector.broadcast %0 : vector<1x32xf32> to vector<2x32xf32>
    %15 = arith.mulf %13, %14 : vector<2x32xf32>
    %cst = arith.constant dense<0.000000e+00> : vector<2x32xf32>
    %16 = tpu.matmul %8, %1, %cst {dimension_numbers = #tpu.dot_dimension_numbers<[1], [0], [0], [1], [0, 0, 1, 1], [], []>} : vector<2x32xf32>, vector<32x32xf32>, vector<2x32xf32> -> vector<2x32xf32>
    %17 = arith.addf %15, %16 : vector<2x32xf32>
    %18 = vector.broadcast %2 : vector<1x32xf32> to vector<2x32xf32>
    %19 = arith.addf %17, %18 : vector<2x32xf32>
    %cst_21 = arith.constant 0.000000e+00 : f32
    %20 = vector.broadcast %cst_21 : f32 to vector<2x32xf32>
    %21 = arith.maximumf %19, %20 : vector<2x32xf32>
    %22 = tpu.concatenate %21, %10 in 1 : vector<2x32xf32>, vector<2x32xf32> -> vector<2x64xf32>
    %cst_22 = arith.constant dense<0.000000e+00> : vector<2x32xf32>
    %23 = tpu.matmul %22, %3, %cst_22 {dimension_numbers = #tpu.dot_dimension_numbers<[1], [0], [0], [1], [0, 0, 1, 1], [], []>} : vector<2x64xf32>, vector<64x32xf32>, vector<2x32xf32> -> vector<2x32xf32>
    %24 = vector.broadcast %4 : vector<1x32xf32> to vector<2x32xf32>
    %25 = arith.addf %23, %24 : vector<2x32xf32>
    %cst_23 = arith.constant 0.000000e+00 : f32
    %26 = vector.broadcast %cst_23 : f32 to vector<2x32xf32>
    %27 = arith.maximumf %25, %26 : vector<2x32xf32>
    %c1_24 = arith.constant 1 : index
    %c0_25 = arith.constant 0 : index
    %c0_26 = arith.constant 0 : index
    %28 = vector.load %arg1[%c1_24, %c0_25, %c0_26] : memref<8x2x1xf32, #tpu.memory_space<vmem>>, vector<1x2x1xf32>
    %29 = vector.shape_cast %28 : vector<1x2x1xf32> to vector<2x1xf32>
    %30 = vector.broadcast %29 : vector<2x1xf32> to vector<2x32xf32>
    %31 = vector.broadcast %0 : vector<1x32xf32> to vector<2x32xf32>
    %32 = arith.mulf %30, %31 : vector<2x32xf32>
    %cst_27 = arith.constant dense<0.000000e+00> : vector<2x32xf32>
    %33 = tpu.matmul %21, %1, %cst_27 {dimension_numbers = #tpu.dot_dimension_numbers<[1], [0], [0], [1], [0, 0, 1, 1], [], []>} : vector<2x32xf32>, vector<32x32xf32>, vector<2x32xf32> -> vector<2x32xf32>
    %34 = arith.addf %32, %33 : vector<2x32xf32>
    %35 = vector.broadcast %2 : vector<1x32xf32> to vector<2x32xf32>
    %36 = arith.addf %34, %35 : vector<2x32xf32>
    %cst_28 = arith.constant 0.000000e+00 : f32
    %37 = vector.broadcast %cst_28 : f32 to vector<2x32xf32>
    %38 = arith.maximumf %36, %37 : vector<2x32xf32>
    %39 = tpu.concatenate %38, %27 in 1 : vector<2x32xf32>, vector<2x32xf32> -> vector<2x64xf32>
    %cst_29 = arith.constant dense<0.000000e+00> : vector<2x32xf32>
    %40 = tpu.matmul %39, %3, %cst_29 {dimension_numbers = #tpu.dot_dimension_numbers<[1], [0], [0], [1], [0, 0, 1, 1], [], []>} : vector<2x64xf32>, vector<64x32xf32>, vector<2x32xf32> -> vector<2x32xf32>
    %41 = vector.broadcast %4 : vector<1x32xf32> to vector<2x32xf32>
    %42 = arith.addf %40, %41 : vector<2x32xf32>
    %cst_30 = arith.constant 0.000000e+00 : f32
    %43 = vector.broadcast %cst_30 : f32 to vector<2x32xf32>
    %44 = arith.maximumf %42, %43 : vector<2x32xf32>
    %c2 = arith.constant 2 : index
    %c0_31 = arith.constant 0 : index
    %c0_32 = arith.constant 0 : index
    %45 = vector.load %arg1[%c2, %c0_31, %c0_32] : memref<8x2x1xf32, #tpu.memory_space<vmem>>, vector<1x2x1xf32>
    %46 = vector.shape_cast %45 : vector<1x2x1xf32> to vector<2x1xf32>
    %47 = vector.broadcast %46 : vector<2x1xf32> to vector<2x32xf32>
    %48 = vector.broadcast %0 : vector<1x32xf32> to vector<2x32xf32>
    %49 = arith.mulf %47, %48 : vector<2x32xf32>
    %cst_33 = arith.constant dense<0.000000e+00> : vector<2x32xf32>
    %50 = tpu.matmul %38, %1, %cst_33 {dimension_numbers = #tpu.dot_dimension_numbers<[1], [0], [0], [1], [0, 0, 1, 1], [], []>} : vector<2x32xf32>, vector<32x32xf32>, vector<2x32xf32> -> vector<2x32xf32>
    %51 = arith.addf %49, %50 : vector<2x32xf32>
    %52 = vector.broadcast %2 : vector<1x32xf32> to vector<2x32xf32>
    %53 = arith.addf %51, %52 : vector<2x32xf32>
    %cst_34 = arith.constant 0.000000e+00 : f32
    %54 = vector.broadcast %cst_34 : f32 to vector<2x32xf32>
    %55 = arith.maximumf %53, %54 : vector<2x32xf32>
    %56 = tpu.concatenate %55, %44 in 1 : vector<2x32xf32>, vector<2x32xf32> -> vector<2x64xf32>
    %cst_35 = arith.constant dense<0.000000e+00> : vector<2x32xf32>
    %57 = tpu.matmul %56, %3, %cst_35 {dimension_numbers = #tpu.dot_dimension_numbers<[1], [0], [0], [1], [0, 0, 1, 1], [], []>} : vector<2x64xf32>, vector<64x32xf32>, vector<2x32xf32> -> vector<2x32xf32>
    %58 = vector.broadcast %4 : vector<1x32xf32> to vector<2x32xf32>
    %59 = arith.addf %57, %58 : vector<2x32xf32>
    %cst_36 = arith.constant 0.000000e+00 : f32
    %60 = vector.broadcast %cst_36 : f32 to vector<2x32xf32>
    %61 = arith.maximumf %59, %60 : vector<2x32xf32>
    %c3 = arith.constant 3 : index
    %c0_37 = arith.constant 0 : index
    %c0_38 = arith.constant 0 : index
    %62 = vector.load %arg1[%c3, %c0_37, %c0_38] : memref<8x2x1xf32, #tpu.memory_space<vmem>>, vector<1x2x1xf32>
    %63 = vector.shape_cast %62 : vector<1x2x1xf32> to vector<2x1xf32>
    %64 = vector.broadcast %63 : vector<2x1xf32> to vector<2x32xf32>
    %65 = vector.broadcast %0 : vector<1x32xf32> to vector<2x32xf32>
    %66 = arith.mulf %64, %65 : vector<2x32xf32>
    %cst_39 = arith.constant dense<0.000000e+00> : vector<2x32xf32>
    %67 = tpu.matmul %55, %1, %cst_39 {dimension_numbers = #tpu.dot_dimension_numbers<[1], [0], [0], [1], [0, 0, 1, 1], [], []>} : vector<2x32xf32>, vector<32x32xf32>, vector<2x32xf32> -> vector<2x32xf32>
    %68 = arith.addf %66, %67 : vector<2x32xf32>
    %69 = vector.broadcast %2 : vector<1x32xf32> to vector<2x32xf32>
    %70 = arith.addf %68, %69 : vector<2x32xf32>
    %cst_40 = arith.constant 0.000000e+00 : f32
    %71 = vector.broadcast %cst_40 : f32 to vector<2x32xf32>
    %72 = arith.maximumf %70, %71 : vector<2x32xf32>
    %73 = tpu.concatenate %72, %61 in 1 : vector<2x32xf32>, vector<2x32xf32> -> vector<2x64xf32>
    %cst_41 = arith.constant dense<0.000000e+00> : vector<2x32xf32>
    %74 = tpu.matmul %73, %3, %cst_41 {dimension_numbers = #tpu.dot_dimension_numbers<[1], [0], [0], [1], [0, 0, 1, 1], [], []>} : vector<2x64xf32>, vector<64x32xf32>, vector<2x32xf32> -> vector<2x32xf32>
    %75 = vector.broadcast %4 : vector<1x32xf32> to vector<2x32xf32>
    %76 = arith.addf %74, %75 : vector<2x32xf32>
    %cst_42 = arith.constant 0.000000e+00 : f32
    %77 = vector.broadcast %cst_42 : f32 to vector<2x32xf32>
    %78 = arith.maximumf %76, %77 : vector<2x32xf32>
    %c4 = arith.constant 4 : index
    %c0_43 = arith.constant 0 : index
    %c0_44 = arith.constant 0 : index
    %79 = vector.load %arg1[%c4, %c0_43, %c0_44] : memref<8x2x1xf32, #tpu.memory_space<vmem>>, vector<1x2x1xf32>
    %80 = vector.shape_cast %79 : vector<1x2x1xf32> to vector<2x1xf32>
    %81 = vector.broadcast %80 : vector<2x1xf32> to vector<2x32xf32>
    %82 = vector.broadcast %0 : vector<1x32xf32> to vector<2x32xf32>
    %83 = arith.mulf %81, %82 : vector<2x32xf32>
    %cst_45 = arith.constant dense<0.000000e+00> : vector<2x32xf32>
    %84 = tpu.matmul %72, %1, %cst_45 {dimension_numbers = #tpu.dot_dimension_numbers<[1], [0], [0], [1], [0, 0, 1, 1], [], []>} : vector<2x32xf32>, vector<32x32xf32>, vector<2x32xf32> -> vector<2x32xf32>
    %85 = arith.addf %83, %84 : vector<2x32xf32>
    %86 = vector.broadcast %2 : vector<1x32xf32> to vector<2x32xf32>
    %87 = arith.addf %85, %86 : vector<2x32xf32>
    %cst_46 = arith.constant 0.000000e+00 : f32
    %88 = vector.broadcast %cst_46 : f32 to vector<2x32xf32>
    %89 = arith.maximumf %87, %88 : vector<2x32xf32>
    %90 = tpu.concatenate %89, %78 in 1 : vector<2x32xf32>, vector<2x32xf32> -> vector<2x64xf32>
    %cst_47 = arith.constant dense<0.000000e+00> : vector<2x32xf32>
    %91 = tpu.matmul %90, %3, %cst_47 {dimension_numbers = #tpu.dot_dimension_numbers<[1], [0], [0], [1], [0, 0, 1, 1], [], []>} : vector<2x64xf32>, vector<64x32xf32>, vector<2x32xf32> -> vector<2x32xf32>
    %92 = vector.broadcast %4 : vector<1x32xf32> to vector<2x32xf32>
    %93 = arith.addf %91, %92 : vector<2x32xf32>
    %cst_48 = arith.constant 0.000000e+00 : f32
    %94 = vector.broadcast %cst_48 : f32 to vector<2x32xf32>
    %95 = arith.maximumf %93, %94 : vector<2x32xf32>
    %c5 = arith.constant 5 : index
    %c0_49 = arith.constant 0 : index
    %c0_50 = arith.constant 0 : index
    %96 = vector.load %arg1[%c5, %c0_49, %c0_50] : memref<8x2x1xf32, #tpu.memory_space<vmem>>, vector<1x2x1xf32>
    %97 = vector.shape_cast %96 : vector<1x2x1xf32> to vector<2x1xf32>
    %98 = vector.broadcast %97 : vector<2x1xf32> to vector<2x32xf32>
    %99 = vector.broadcast %0 : vector<1x32xf32> to vector<2x32xf32>
    %100 = arith.mulf %98, %99 : vector<2x32xf32>
    %cst_51 = arith.constant dense<0.000000e+00> : vector<2x32xf32>
    %101 = tpu.matmul %89, %1, %cst_51 {dimension_numbers = #tpu.dot_dimension_numbers<[1], [0], [0], [1], [0, 0, 1, 1], [], []>} : vector<2x32xf32>, vector<32x32xf32>, vector<2x32xf32> -> vector<2x32xf32>
    %102 = arith.addf %100, %101 : vector<2x32xf32>
    %103 = vector.broadcast %2 : vector<1x32xf32> to vector<2x32xf32>
    %104 = arith.addf %102, %103 : vector<2x32xf32>
    %cst_52 = arith.constant 0.000000e+00 : f32
    %105 = vector.broadcast %cst_52 : f32 to vector<2x32xf32>
    %106 = arith.maximumf %104, %105 : vector<2x32xf32>
    %107 = tpu.concatenate %106, %95 in 1 : vector<2x32xf32>, vector<2x32xf32> -> vector<2x64xf32>
    %cst_53 = arith.constant dense<0.000000e+00> : vector<2x32xf32>
    %108 = tpu.matmul %107, %3, %cst_53 {dimension_numbers = #tpu.dot_dimension_numbers<[1], [0], [0], [1], [0, 0, 1, 1], [], []>} : vector<2x64xf32>, vector<64x32xf32>, vector<2x32xf32> -> vector<2x32xf32>
    %109 = vector.broadcast %4 : vector<1x32xf32> to vector<2x32xf32>
    %110 = arith.addf %108, %109 : vector<2x32xf32>
    %cst_54 = arith.constant 0.000000e+00 : f32
    %111 = vector.broadcast %cst_54 : f32 to vector<2x32xf32>
    %112 = arith.maximumf %110, %111 : vector<2x32xf32>
    %c6 = arith.constant 6 : index
    %c0_55 = arith.constant 0 : index
    %c0_56 = arith.constant 0 : index
    %113 = vector.load %arg1[%c6, %c0_55, %c0_56] : memref<8x2x1xf32, #tpu.memory_space<vmem>>, vector<1x2x1xf32>
    %114 = vector.shape_cast %113 : vector<1x2x1xf32> to vector<2x1xf32>
    %115 = vector.broadcast %114 : vector<2x1xf32> to vector<2x32xf32>
    %116 = vector.broadcast %0 : vector<1x32xf32> to vector<2x32xf32>
    %117 = arith.mulf %115, %116 : vector<2x32xf32>
    %cst_57 = arith.constant dense<0.000000e+00> : vector<2x32xf32>
    %118 = tpu.matmul %106, %1, %cst_57 {dimension_numbers = #tpu.dot_dimension_numbers<[1], [0], [0], [1], [0, 0, 1, 1], [], []>} : vector<2x32xf32>, vector<32x32xf32>, vector<2x32xf32> -> vector<2x32xf32>
    %119 = arith.addf %117, %118 : vector<2x32xf32>
    %120 = vector.broadcast %2 : vector<1x32xf32> to vector<2x32xf32>
    %121 = arith.addf %119, %120 : vector<2x32xf32>
    %cst_58 = arith.constant 0.000000e+00 : f32
    %122 = vector.broadcast %cst_58 : f32 to vector<2x32xf32>
    %123 = arith.maximumf %121, %122 : vector<2x32xf32>
    %124 = tpu.concatenate %123, %112 in 1 : vector<2x32xf32>, vector<2x32xf32> -> vector<2x64xf32>
    %cst_59 = arith.constant dense<0.000000e+00> : vector<2x32xf32>
    %125 = tpu.matmul %124, %3, %cst_59 {dimension_numbers = #tpu.dot_dimension_numbers<[1], [0], [0], [1], [0, 0, 1, 1], [], []>} : vector<2x64xf32>, vector<64x32xf32>, vector<2x32xf32> -> vector<2x32xf32>
    %126 = vector.broadcast %4 : vector<1x32xf32> to vector<2x32xf32>
    %127 = arith.addf %125, %126 : vector<2x32xf32>
    %cst_60 = arith.constant 0.000000e+00 : f32
    %128 = vector.broadcast %cst_60 : f32 to vector<2x32xf32>
    %129 = arith.maximumf %127, %128 : vector<2x32xf32>
    %c7 = arith.constant 7 : index
    %c0_61 = arith.constant 0 : index
    %c0_62 = arith.constant 0 : index
    %130 = vector.load %arg1[%c7, %c0_61, %c0_62] : memref<8x2x1xf32, #tpu.memory_space<vmem>>, vector<1x2x1xf32>
    %131 = vector.shape_cast %130 : vector<1x2x1xf32> to vector<2x1xf32>
    %132 = vector.broadcast %131 : vector<2x1xf32> to vector<2x32xf32>
    %133 = vector.broadcast %0 : vector<1x32xf32> to vector<2x32xf32>
    %134 = arith.mulf %132, %133 : vector<2x32xf32>
    %cst_63 = arith.constant dense<0.000000e+00> : vector<2x32xf32>
    %135 = tpu.matmul %123, %1, %cst_63 {dimension_numbers = #tpu.dot_dimension_numbers<[1], [0], [0], [1], [0, 0, 1, 1], [], []>} : vector<2x32xf32>, vector<32x32xf32>, vector<2x32xf32> -> vector<2x32xf32>
    %136 = arith.addf %134, %135 : vector<2x32xf32>
    %137 = vector.broadcast %2 : vector<1x32xf32> to vector<2x32xf32>
    %138 = arith.addf %136, %137 : vector<2x32xf32>
    %cst_64 = arith.constant 0.000000e+00 : f32
    %139 = vector.broadcast %cst_64 : f32 to vector<2x32xf32>
    %140 = arith.maximumf %138, %139 : vector<2x32xf32>
    %141 = tpu.concatenate %140, %129 in 1 : vector<2x32xf32>, vector<2x32xf32> -> vector<2x64xf32>
    %cst_65 = arith.constant dense<0.000000e+00> : vector<2x32xf32>
    %142 = tpu.matmul %141, %3, %cst_65 {dimension_numbers = #tpu.dot_dimension_numbers<[1], [0], [0], [1], [0, 0, 1, 1], [], []>} : vector<2x64xf32>, vector<64x32xf32>, vector<2x32xf32> -> vector<2x32xf32>
    %143 = vector.broadcast %4 : vector<1x32xf32> to vector<2x32xf32>
    %144 = arith.addf %142, %143 : vector<2x32xf32>
    %cst_66 = arith.constant 0.000000e+00 : f32
    %145 = vector.broadcast %cst_66 : f32 to vector<2x32xf32>
    %146 = arith.maximumf %144, %145 : vector<2x32xf32>
    %147 = vector.shape_cast %27 : vector<2x32xf32> to vector<1x2x32xf32>
    %148 = vector.shape_cast %44 : vector<2x32xf32> to vector<1x2x32xf32>
    %149 = vector.shape_cast %61 : vector<2x32xf32> to vector<1x2x32xf32>
    %150 = vector.shape_cast %78 : vector<2x32xf32> to vector<1x2x32xf32>
    %151 = vector.shape_cast %95 : vector<2x32xf32> to vector<1x2x32xf32>
    %152 = vector.shape_cast %112 : vector<2x32xf32> to vector<1x2x32xf32>
    %153 = vector.shape_cast %129 : vector<2x32xf32> to vector<1x2x32xf32>
    %154 = vector.shape_cast %146 : vector<2x32xf32> to vector<1x2x32xf32>
    %155 = tpu.concatenate %147, %148, %149, %150, %151, %152, %153, %154 in 0 : vector<1x2x32xf32>, vector<1x2x32xf32>, vector<1x2x32xf32>, vector<1x2x32xf32>, vector<1x2x32xf32>, vector<1x2x32xf32>, vector<1x2x32xf32>, vector<1x2x32xf32> -> vector<8x2x32xf32>
    %156 = vector.shape_cast %5 : vector<1x32xf32> to vector<1x1x32xf32>
    %157 = vector.broadcast %156 : vector<1x1x32xf32> to vector<8x2x32xf32>
    %158 = arith.mulf %155, %157 : vector<8x2x32xf32>
    %cst_67 = arith.constant dense<0.000000e+00> : vector<8x2xf32>
    %159 = vector.multi_reduction <add>, %158, %cst_67 [2] : vector<8x2x32xf32> to vector<8x2xf32>
    %160 = vector.broadcast %6 : f32 to vector<8x2xf32>
    %161 = arith.addf %159, %160 : vector<8x2xf32>
    %c0_68 = arith.constant 0 : index
    %c0_69 = arith.constant 0 : index
    %162 = vector.load %arg10[%c0_68, %c0_69] : memref<8x2xf32, #tpu.memory_space<vmem>>, vector<8x2xf32>
    tpu.vector_store %arg10[%c0_68, %c0_69], %161 {strides = array<i32>} : memref<8x2xf32, #tpu.memory_space<vmem>>, vector<8x2xf32>,
    %c0_70 = arith.constant 0 : index
    %c0_71 = arith.constant 0 : index
    %c0_72 = arith.constant 0 : index
    %163 = vector.load %arg11[%c0_70, %c0_71, %c0_72] : memref<2x2x32xf32, #tpu.memory_space<vmem>>, vector<1x2x32xf32>
    %164 = vector.shape_cast %163 : vector<1x2x32xf32> to vector<2x32xf32>
    %165 = vector.shape_cast %140 : vector<2x32xf32> to vector<1x2x32xf32>
    tpu.vector_store %arg11[%c0_70, %c0_71, %c0_72], %165 {strides = array<i32>} : memref<2x2x32xf32, #tpu.memory_space<vmem>>, vector<1x2x32xf32>,
    %c1_73 = arith.constant 1 : index
    %c0_74 = arith.constant 0 : index
    %c0_75 = arith.constant 0 : index
    %166 = vector.load %arg11[%c1_73, %c0_74, %c0_75] : memref<2x2x32xf32, #tpu.memory_space<vmem>>, vector<1x2x32xf32>
    %167 = vector.shape_cast %166 : vector<1x2x32xf32> to vector<2x32xf32>
    %168 = vector.shape_cast %146 : vector<2x32xf32> to vector<1x2x32xf32>
    tpu.vector_store %arg11[%c1_73, %c0_74, %c0_75], %168 {strides = array<i32>} : memref<2x2x32xf32, #tpu.memory_space<vmem>>, vector<1x2x32xf32>,
    return
  }
  func.func @transform_0(%arg0: i32) -> (i32, i32, i32) {
    %c0_i32 = arith.constant 0 : i32
    %c0_i32_0 = arith.constant 0 : i32
    %c0_i32_1 = arith.constant 0 : i32
    %c0_i32_2 = arith.constant 0 : i32
    return %c0_i32, %c0_i32_0, %c0_i32_1 : i32, i32, i32
  }
  func.func @transform_1(%arg0: i32) -> (i32, i32, i32) {
    %c0_i32 = arith.constant 0 : i32
    %c0_i32_0 = arith.constant 0 : i32
    %c0_i32_1 = arith.constant 0 : i32
    %c0_i32_2 = arith.constant 0 : i32
    return %c0_i32, %c0_i32_0, %c0_i32_1 : i32, i32, i32
  }
  func.func @transform_2(%arg0: i32) -> (i32, i32) {
    %c0_i32 = arith.constant 0 : i32
    %c0_i32_0 = arith.constant 0 : i32
    %c0_i32_1 = arith.constant 0 : i32
    return %c0_i32, %c0_i32_0 : i32, i32
  }
  func.func @transform_3(%arg0: i32) -> (i32, i32) {
    %c0_i32 = arith.constant 0 : i32
    %c0_i32_0 = arith.constant 0 : i32
    %c0_i32_1 = arith.constant 0 : i32
    return %c0_i32, %c0_i32_0 : i32, i32
  }
  func.func @transform_4(%arg0: i32) -> (i32, i32) {
    %c0_i32 = arith.constant 0 : i32
    %c0_i32_0 = arith.constant 0 : i32
    %c0_i32_1 = arith.constant 0 : i32
    return %c0_i32, %c0_i32_0 : i32, i32
  }
  func.func @transform_5(%arg0: i32) -> (i32, i32) {
    %c0_i32 = arith.constant 0 : i32
    %c0_i32_0 = arith.constant 0 : i32
    %c0_i32_1 = arith.constant 0 : i32
    return %c0_i32, %c0_i32_0 : i32, i32
  }
  func.func @transform_6(%arg0: i32) -> (i32, i32) {
    %c0_i32 = arith.constant 0 : i32
    %c0_i32_0 = arith.constant 0 : i32
    %c0_i32_1 = arith.constant 0 : i32
    return %c0_i32, %c0_i32_0 : i32, i32
  }
  func.func @transform_7(%arg0: i32) -> (i32, i32) {
    %c0_i32 = arith.constant 0 : i32
    %c0_i32_0 = arith.constant 0 : i32
    %c0_i32_1 = arith.constant 0 : i32
    return %c0_i32, %c0_i32_0 : i32, i32
  }
  func.func @transform_8(%arg0: i32) -> (i32, i32) {
    %c0_i32 = arith.constant 0 : i32
    %c0_i32_0 = arith.constant 0 : i32
    %c0_i32_1 = arith.constant 0 : i32
    return %c0_i32, %c0_i32_0 : i32, i32
  }
  func.func @transform_9(%arg0: i32) -> (i32, i32) {
    %c0_i32 = arith.constant 0 : i32
    %c0_i32_0 = arith.constant 0 : i32
    %c0_i32_1 = arith.constant 0 : i32
    return %c0_i32, %c0_i32_0 : i32, i32
  }
  func.func @transform_10(%arg0: i32) -> (i32, i32, i32) {
    %c0_i32 = arith.constant 0 : i32
    %c0_i32_0 = arith.constant 0 : i32
    %c0_i32_1 = arith.constant 0 : i32
    %c0_i32_2 = arith.constant 0 : i32
    return %c0_i32, %c0_i32_0, %c0_i32_1 : i32, i32, i32
  }
}

</mosaic_0001>

<llo_original>
// kernel: tpu_custom_call.1
$region0: #{tpu_custom_call.1}
  #allocation0 [shape = 'u32[]', space=smem, size = 0x4, offset = 0x4, fixed_abs, tag = 'smem constant byte address 0x4 - core index']
  #allocation1 [shape = 'u32[144,128]{1,0:T(1,128)}', space=vmem, size = 0x12000, scoped, tag = 'internal scratch']
  #allocation2 [shape = 'f32[1,1]{1,0:T(1,128)S(6)}', space=smem, size = 0x200, scoped, tag = 'scoped memory for tpu_custom_call.1']
  %s0 = inlined_call_operand.vmem [shape: f32[8,2,1], index: 0, kind: input, shape index: {}]
  %s1 = inlined_call_operand.vmem [shape: f32[2,2,32], index: 1, kind: input, shape index: {}]
  %s2 = inlined_call_operand.vmem [shape: f32[1,32], index: 2, kind: input, shape index: {}]
  %s3 = inlined_call_operand.vmem [shape: f32[32,32], index: 3, kind: input, shape index: {}]
  %s4 = inlined_call_operand.vmem [shape: f32[1,32], index: 4, kind: input, shape index: {}]
  %s5 = inlined_call_operand.vmem [shape: f32[64,32], index: 5, kind: input, shape index: {}]
  %s6 = inlined_call_operand.vmem [shape: f32[1,32], index: 6, kind: input, shape index: {}]
  %s7 = inlined_call_operand.vmem [shape: f32[1,32], index: 7, kind: input, shape index: {}]
  %s8 = inlined_call_operand.<no memory space> [shape: f32[1,1], index: 8, kind: input, shape index: {}]
  %s9 = inlined_call_operand.vmem [shape: f32[8,2], index: 9, kind: output, shape index: {0}]
  %s10 = inlined_call_operand.hbm [shape: f32[2,2,32], index: 10, kind: output, shape index: {1}]
  %11 = xla_tuple %s9, %s10
  %s12 = sld [smem:[#allocation0]]
  $region54: #{tpu_custom_call.1} parent=0
    _
  %s14 = ssub.s32 1, %s12
  %s15 = scalar_select 0, %s14, %s12
  %16 = sst [smem:[#allocation2]] %s8
  $region1: #{tpu_custom_call.1} parent=0
    #allocation3 [shape = 'u8[2048]{0}', space=vmem, size = 0x800, scoped, tag = 'output window, operand 1, single buffered']
    #allocation4 [shape = 's32[1]{0}', space=sflag, size = 0x4, scoped, tag = 'scoped memory for tpu_custom_call.1']
    %17 = vsyncpa [#allocation4], 0
    // Predicated region
    $region2: #{tpu_custom_call.1} parent=1 // pred_check
      _
    $region3: #{tpu_custom_call.1} parent=1 // pred_check_branch
      %19 = sbr.rel (0) target = $region5
    $region4: #{tpu_custom_call.1} parent=1 // pred_region
      _
    $region5: #{tpu_custom_call.1} parent=1 // pred_fallthru
      _
    // Predicated region
    $region6: #{tpu_custom_call.1} parent=1 // pred_check
      _
    $region7: #{tpu_custom_call.1} parent=1 // pred_check_branch
      %21 = sbr.rel (0) target = $region9
    $region8: #{tpu_custom_call.1} parent=1 // pred_region
      _
    $region9: #{tpu_custom_call.1} parent=1 // pred_fallthru
      _
    // Predicated region
    $region10: #{tpu_custom_call.1} parent=1 // pred_check
      _
    $region11: #{tpu_custom_call.1} parent=1 // pred_check_branch
      %23 = sbr.rel (0) target = $region13
    $region12: #{tpu_custom_call.1} parent=1 // pred_region
      _
    $region13: #{tpu_custom_call.1} parent=1 // pred_fallthru
      _
    // Predicated region
    $region14: #{tpu_custom_call.1} parent=1 // pred_check
      _
    $region15: #{tpu_custom_call.1} parent=1 // pred_check_branch
      %25 = sbr.rel (0) target = $region17
    $region16: #{tpu_custom_call.1} parent=1 // pred_region
      _
    $region17: #{tpu_custom_call.1} parent=1 // pred_fallthru
      _
    // Predicated region
    $region18: #{tpu_custom_call.1} parent=1 // pred_check
      _
    $region19: #{tpu_custom_call.1} parent=1 // pred_check_branch
      %27 = sbr.rel (0) target = $region21
    $region20: #{tpu_custom_call.1} parent=1 // pred_region
      _
    $region21: #{tpu_custom_call.1} parent=1 // pred_fallthru
      _
    // Predicated region
    $region22: #{tpu_custom_call.1} parent=1 // pred_check
      _
    $region23: #{tpu_custom_call.1} parent=1 // pred_check_branch
      %29 = sbr.rel (0) target = $region25
    $region24: #{tpu_custom_call.1} parent=1 // pred_region
      _
    $region25: #{tpu_custom_call.1} parent=1 // pred_fallthru
      _
    // Predicated region
    $region26: #{tpu_custom_call.1} parent=1 // pred_check
      _
    $region27: #{tpu_custom_call.1} parent=1 // pred_check_branch
      %31 = sbr.rel (0) target = $region29
    $region28: #{tpu_custom_call.1} parent=1 // pred_region
      _
    $region29: #{tpu_custom_call.1} parent=1 // pred_fallthru
      _
    // Predicated region
    $region30: #{tpu_custom_call.1} parent=1 // pred_check
      _
    $region31: #{tpu_custom_call.1} parent=1 // pred_check_branch
      %33 = sbr.rel (0) target = $region33
    $region32: #{tpu_custom_call.1} parent=1 // pred_region
      _
    $region33: #{tpu_custom_call.1} parent=1 // pred_fallthru
      _
    // Predicated region
    $region34: #{tpu_custom_call.1} parent=1 // pred_check
      _
    $region35: #{tpu_custom_call.1} parent=1 // pred_check_branch
      %35 = sbr.rel (0) target = $region37
    $region36: #{tpu_custom_call.1} parent=1 // pred_region
      _
    $region37: #{tpu_custom_call.1} parent=1 // pred_fallthru
      _
    %v36 = vld [vmem:[%s2] sm:$0x1]
    %v37 = vld [vmem:[%s3] sm:$0xff]
    %v38 = vld [vmem:[%s3 + $0x8] sm:$0xff]
    %v39 = vld [vmem:[%s3 + $0x10] sm:$0xff]
    %v40 = vld [vmem:[%s3 + $0x18] sm:$0xff]
    %v41 = vld [vmem:[%s4] sm:$0x1]
    %v42 = vld [vmem:[%s5] sm:$0xff]
    %v43 = vld [vmem:[%s5 + $0x8] sm:$0xff]
    %v44 = vld [vmem:[%s5 + $0x10] sm:$0xff]
    %v45 = vld [vmem:[%s5 + $0x18] sm:$0xff]
    %v46 = vld [vmem:[%s5 + $0x20] sm:$0xff]
    %v47 = vld [vmem:[%s5 + $0x28] sm:$0xff]
    %v48 = vld [vmem:[%s5 + $0x30] sm:$0xff]
    %v49 = vld [vmem:[%s5 + $0x38] sm:$0xff]
    %v50 = vld [vmem:[%s6] sm:$0x1]
    %v51 = vld [vmem:[%s7] sm:$0x1]
    %s52 = sld [smem:[#allocation2]]
    %v53 = vld [vmem:[%s1] sm:$0x3]
    %s54 = scalar_lea.vmem %s1, 2
    %v55 = vld [vmem:[%s54] sm:$0x3]
    %v56 = vld [vmem:[%s0] sm:$0x3]
    %58 = vset.pattern.permute.xlu0 0
    %59 = vperm.xlu0 %58, %v56
    %v60 = vpop.permute.xlu0 %59
    %v63 = vlaneseq
    %v64 = vshrl.u32 %v63, 7
    %v65 = vsub.s32 0, %v64
    %v66 = vrot.slane %v36, %v65
    %v68 = vmul.f32 %v60, %v66
    %vm69 = vcmask 261120
    %v71 = vsel %vm69, %v53, 0
    %73 = vmatprep.subr.mxu0 0.0
    %74 = vmatpush1.msra.mxu0 %v37
    %75 = vmatprep.subr.mxu0 0.0
    %76 = vmatpush1.msra.mxu0 %v38
    %77 = vmatprep.subr.mxu0 0.0
    %78 = vmatpush1.msra.mxu0 %v39
    %79 = vmatprep.subr.mxu0 0.0
    %80 = vmatpush1.msra.mxu0 %v40
    %81 = vmatprep.subr.mxu0 0.0
    %82 = vmatpush1.msra.mxu0 0.0
    %83 = vmatprep.subr.mxu0 0.0
    %84 = vmatpush1.msra.mxu0 0.0
    %85 = vmatprep.subr.mxu0 0.0
    %86 = vmatpush1.msra.mxu0 0.0
    %87 = vmatprep.subr.mxu0 0.0
    %88 = vmatpush1.msra.mxu0 0.0
    %89 = vmatprep.subr.mxu0 0.0
    %90 = vmatpush1.msra.mxu0 0.0
    %91 = vmatprep.subr.mxu0 0.0
    %92 = vmatpush1.msra.mxu0 0.0
    %93 = vmatprep.subr.mxu0 0.0
    %94 = vmatpush1.msra.mxu0 0.0
    %95 = vmatprep.subr.mxu0 0.0
    %96 = vmatpush1.msra.mxu0 0.0
    %97 = vmatprep.subr.mxu0 0.0
    %98 = vmatpush1.msra.mxu0 0.0
    %99 = vmatprep.subr.mxu0 0.0
    %100 = vmatpush1.msra.mxu0 0.0
    %101 = vmatprep.subr.mxu0 0.0
    %102 = vmatpush1.msra.mxu0 0.0
    %103 = vmatprep.subr.mxu0 0.0
    %104 = vmatpush1.msra.mxu0 0.0
    %105 = vmatprep.subr.mxu0 0.0
    %106 = vmatpush1.msra.mxu0 0.0
    %107 = vmatprep.subr.mxu0 0.0
    %108 = vmatpush1.msra.mxu0 0.0
    %109 = vmatprep.subr.mxu0 0.0
    %110 = vmatpush1.msra.mxu0 0.0
    %111 = vmatprep.subr.mxu0 0.0
    %112 = vmatpush1.msra.mxu0 0.0
    %113 = vmatprep.subr.mxu0 0.0
    %114 = vmatpush1.msra.mxu0 0.0
    %115 = vmatprep.subr.mxu0 0.0
    %116 = vmatpush1.msra.mxu0 0.0
    %117 = vmatprep.subr.mxu0 0.0
    %118 = vmatpush1.msra.mxu0 0.0
    %119 = vmatprep.subr.mxu0 0.0
    %120 = vmatpush1.msra.mxu0 0.0
    %121 = vmatprep.subr.mxu0 0.0
    %122 = vmatpush1.msra.mxu0 0.0
    %123 = vmatprep.subr.mxu0 0.0
    %124 = vmatpush1.msra.mxu0 0.0
    %125 = vmatprep.subr.mxu0 0.0
    %126 = vmatpush1.msra.mxu0 0.0
    %127 = vmatprep.subr.mxu0 0.0
    %128 = vmatpush1.msra.mxu0 0.0
    %129 = vmatprep.subr.mxu0 0.0
    %130 = vmatpush1.msra.mxu0 0.0
    %131 = vmatprep.subr.mxu0 0.0
    %132 = vmatpush1.msra.mxu0 0.0
    %133 = vmatprep.subr.mxu0 0.0
    %134 = vmatpush1.msra.mxu0 0.0
    %135 = vmatprep.subr.mxu0 0.0
    %136 = vmatpush1.msra.mxu0 0.0
    %137 = vmatprep.mubr.f32.mxu0 0.0
    %138 = vmatmul.mubr.f32.gmra.mrb[0].mxu0 %v71
    %v139 = vpop.f32.mrb[0].mxu0
    %v140 = vadd.f32 0.0, %v139
    %v141 = vpop.f32.mrb[0].mxu0
    %142 = vdwg.mxu0
    %v143 = vadd.f32 %v68, %v140
    %v145 = vlaneseq
    %v146 = vshrl.u32 %v145, 7
    %v147 = vsub.s32 0, %v146
    %v148 = vrot.slane %v41, %v147
    %v150 = vadd.f32 %v143, %v148
    %v151 = vmax.f32 %v150, 0.0
    %153 = vrot.lane.b32.xlu0 %v55, 32
    %v154 = vpop.permute.xlu0 %153
    %v156 = vsel %vm69, %v151, %v154
    %v158 = vlaneseq
    %v159 = vshrl.u32 %v158, 7
    %v160 = vsub.s32 0, %v159
    %v161 = vrot.slane %v50, %v160
    %vm163 = vcmask 523264
    %v165 = vsel %vm163, %v156, 0
    %167 = vmatprep.subr.mxu0 0.0
    %168 = vmatpush1.msra.mxu0 %v42
    %169 = vmatprep.subr.mxu0 0.0
    %170 = vmatpush1.msra.mxu0 %v43
    %171 = vmatprep.subr.mxu0 0.0
    %172 = vmatpush1.msra.mxu0 %v44
    %173 = vmatprep.subr.mxu0 0.0
    %174 = vmatpush1.msra.mxu0 %v45
    %175 = vmatprep.subr.mxu0 0.0
    %176 = vmatpush1.msra.mxu0 %v46
    %177 = vmatprep.subr.mxu0 0.0
    %178 = vmatpush1.msra.mxu0 %v47
    %179 = vmatprep.subr.mxu0 0.0
    %180 = vmatpush1.msra.mxu0 %v48
    %181 = vmatprep.subr.mxu0 0.0
    %182 = vmatpush1.msra.mxu0 %v49
    %183 = vmatprep.subr.mxu0 0.0
    %184 = vmatpush1.msra.mxu0 0.0
    %185 = vmatprep.subr.mxu0 0.0
    %186 = vmatpush1.msra.mxu0 0.0
    %187 = vmatprep.subr.mxu0 0.0
    %188 = vmatpush1.msra.mxu0 0.0
    %189 = vmatprep.subr.mxu0 0.0
    %190 = vmatpush1.msra.mxu0 0.0
    %191 = vmatprep.subr.mxu0 0.0
    %192 = vmatpush1.msra.mxu0 0.0
    %193 = vmatprep.subr.mxu0 0.0
    %194 = vmatpush1.msra.mxu0 0.0
    %195 = vmatprep.subr.mxu0 0.0
    %196 = vmatpush1.msra.mxu0 0.0
    %197 = vmatprep.subr.mxu0 0.0
    %198 = vmatpush1.msra.mxu0 0.0
    %199 = vmatprep.subr.mxu0 0.0
    %200 = vmatpush1.msra.mxu0 0.0
    %201 = vmatprep.subr.mxu0 0.0
    %202 = vmatpush1.msra.mxu0 0.0
    %203 = vmatprep.subr.mxu0 0.0
    %204 = vmatpush1.msra.mxu0 0.0
    %205 = vmatprep.subr.mxu0 0.0
    %206 = vmatpush1.msra.mxu0 0.0
    %207 = vmatprep.subr.mxu0 0.0
    %208 = vmatpush1.msra.mxu0 0.0
    %209 = vmatprep.subr.mxu0 0.0
    %210 = vmatpush1.msra.mxu0 0.0
    %211 = vmatprep.subr.mxu0 0.0
    %212 = vmatpush1.msra.mxu0 0.0
    %213 = vmatprep.subr.mxu0 0.0
    %214 = vmatpush1.msra.mxu0 0.0
    %215 = vmatprep.subr.mxu0 0.0
    %216 = vmatpush1.msra.mxu0 0.0
    %217 = vmatprep.subr.mxu0 0.0
    %218 = vmatpush1.msra.mxu0 0.0
    %219 = vmatprep.subr.mxu0 0.0
    %220 = vmatpush1.msra.mxu0 0.0
    %221 = vmatprep.subr.mxu0 0.0
    %222 = vmatpush1.msra.mxu0 0.0
    %223 = vmatprep.subr.mxu0 0.0
    %224 = vmatpush1.msra.mxu0 0.0
    %225 = vmatprep.subr.mxu0 0.0
    %226 = vmatpush1.msra.mxu0 0.0
    %227 = vmatprep.subr.mxu0 0.0
    %228 = vmatpush1.msra.mxu0 0.0
    %229 = vmatprep.subr.mxu0 0.0
    %230 = vmatpush1.msra.mxu0 0.0
    %231 = vmatprep.mubr.f32.mxu0 0.0
    %232 = vmatmul.mubr.f32.gmra.mrb[0].mxu0 %v165
    %v233 = vpop.f32.mrb[0].mxu0
    %v234 = vadd.f32 %v161, %v233
    %v235 = vpop.f32.mrb[0].mxu0
    %236 = vdwg.mxu0
    %v237 = vmax.f32 %v234, 0.0
    %s238 = scalar_lea.vmem %s0, 2
    %v239 = vld [vmem:[%s238] sm:$0x3]
    %241 = vset.pattern.permute.xlu0 0
    %242 = vperm.xlu0 %241, %v239
    %v243 = vpop.permute.xlu0 %242
    %v245 = vmul.f32 %v243, %v66
    %v247 = vsel %vm69, %v151, 0
    %249 = vmatprep.subr.mxu0 0.0
    %250 = vmatpush1.msra.mxu0 %v37
    %251 = vmatprep.subr.mxu0 0.0
    %252 = vmatpush1.msra.mxu0 %v38
    %253 = vmatprep.subr.mxu0 0.0
    %254 = vmatpush1.msra.mxu0 %v39
    %255 = vmatprep.subr.mxu0 0.0
    %256 = vmatpush1.msra.mxu0 %v40
    %257 = vmatprep.subr.mxu0 0.0
    %258 = vmatpush1.msra.mxu0 0.0
    %259 = vmatprep.subr.mxu0 0.0
    %260 = vmatpush1.msra.mxu0 0.0
    %261 = vmatprep.subr.mxu0 0.0
    %262 = vmatpush1.msra.mxu0 0.0
    %263 = vmatprep.subr.mxu0 0.0
    %264 = vmatpush1.msra.mxu0 0.0
    %265 = vmatprep.subr.mxu0 0.0
    %266 = vmatpush1.msra.mxu0 0.0
    %267 = vmatprep.subr.mxu0 0.0
    %268 = vmatpush1.msra.mxu0 0.0
    %269 = vmatprep.subr.mxu0 0.0
    %270 = vmatpush1.msra.mxu0 0.0
    %271 = vmatprep.subr.mxu0 0.0
    %272 = vmatpush1.msra.mxu0 0.0
    %273 = vmatprep.subr.mxu0 0.0
    %274 = vmatpush1.msra.mxu0 0.0
    %275 = vmatprep.subr.mxu0 0.0
    %276 = vmatpush1.msra.mxu0 0.0
    %277 = vmatprep.subr.mxu0 0.0
    %278 = vmatpush1.msra.mxu0 0.0
    %279 = vmatprep.subr.mxu0 0.0
    %280 = vmatpush1.msra.mxu0 0.0
    %281 = vmatprep.subr.mxu0 0.0
    %282 = vmatpush1.msra.mxu0 0.0
    %283 = vmatprep.subr.mxu0 0.0
    %284 = vmatpush1.msra.mxu0 0.0
    %285 = vmatprep.subr.mxu0 0.0
    %286 = vmatpush1.msra.mxu0 0.0
    %287 = vmatprep.subr.mxu0 0.0
    %288 = vmatpush1.msra.mxu0 0.0
    %289 = vmatprep.subr.mxu0 0.0
    %290 = vmatpush1.msra.mxu0 0.0
    %291 = vmatprep.subr.mxu0 0.0
    %292 = vmatpush1.msra.mxu0 0.0
    %293 = vmatprep.subr.mxu0 0.0
    %294 = vmatpush1.msra.mxu0 0.0
    %295 = vmatprep.subr.mxu0 0.0
    %296 = vmatpush1.msra.mxu0 0.0
    %297 = vmatprep.subr.mxu0 0.0
    %298 = vmatpush1.msra.mxu0 0.0
    %299 = vmatprep.subr.mxu0 0.0
    %300 = vmatpush1.msra.mxu0 0.0
    %301 = vmatprep.subr.mxu0 0.0
    %302 = vmatpush1.msra.mxu0 0.0
    %303 = vmatprep.subr.mxu0 0.0
    %304 = vmatpush1.msra.mxu0 0.0
    %305 = vmatprep.subr.mxu0 0.0
    %306 = vmatpush1.msra.mxu0 0.0
    %307 = vmatprep.subr.mxu0 0.0
    %308 = vmatpush1.msra.mxu0 0.0
    %309 = vmatprep.subr.mxu0 0.0
    %310 = vmatpush1.msra.mxu0 0.0
    %311 = vmatprep.subr.mxu0 0.0
    %312 = vmatpush1.msra.mxu0 0.0
    %313 = vmatprep.mubr.f32.mxu0 0.0
    %314 = vmatmul.mubr.f32.gmra.mrb[0].mxu0 %v247
    %v315 = vpop.f32.mrb[0].mxu0
    %v316 = vadd.f32 0.0, %v315
    %v317 = vpop.f32.mrb[0].mxu0
    %318 = vdwg.mxu0
    %v319 = vadd.f32 %v245, %v316
    %v320 = vadd.f32 %v319, %v148
    %v321 = vmax.f32 %v320, 0.0
    %323 = vrot.lane.b32.xlu0 %v237, 32
    %v324 = vpop.permute.xlu0 %323
    %v326 = vsel %vm69, %v321, %v324
    %v328 = vsel %vm163, %v326, 0
    %330 = vmatprep.subr.mxu0 0.0
    %331 = vmatpush1.msra.mxu0 %v42
    %332 = vmatprep.subr.mxu0 0.0
    %333 = vmatpush1.msra.mxu0 %v43
    %334 = vmatprep.subr.mxu0 0.0
    %335 = vmatpush1.msra.mxu0 %v44
    %336 = vmatprep.subr.mxu0 0.0
    %337 = vmatpush1.msra.mxu0 %v45
    %338 = vmatprep.subr.mxu0 0.0
    %339 = vmatpush1.msra.mxu0 %v46
    %340 = vmatprep.subr.mxu0 0.0
    %341 = vmatpush1.msra.mxu0 %v47
    %342 = vmatprep.subr.mxu0 0.0
    %343 = vmatpush1.msra.mxu0 %v48
    %344 = vmatprep.subr.mxu0 0.0
    %345 = vmatpush1.msra.mxu0 %v49
    %346 = vmatprep.subr.mxu0 0.0
    %347 = vmatpush1.msra.mxu0 0.0
    %348 = vmatprep.subr.mxu0 0.0
    %349 = vmatpush1.msra.mxu0 0.0
    %350 = vmatprep.subr.mxu0 0.0
    %351 = vmatpush1.msra.mxu0 0.0
    %352 = vmatprep.subr.mxu0 0.0
    %353 = vmatpush1.msra.mxu0 0.0
    %354 = vmatprep.subr.mxu0 0.0
    %355 = vmatpush1.msra.mxu0 0.0
    %356 = vmatprep.subr.mxu0 0.0
    %357 = vmatpush1.msra.mxu0 0.0
    %358 = vmatprep.subr.mxu0 0.0
    %359 = vmatpush1.msra.mxu0 0.0
    %360 = vmatprep.subr.mxu0 0.0
    %361 = vmatpush1.msra.mxu0 0.0
    %362 = vmatprep.subr.mxu0 0.0
    %363 = vmatpush1.msra.mxu0 0.0
    %364 = vmatprep.subr.mxu0 0.0
    %365 = vmatpush1.msra.mxu0 0.0
    %366 = vmatprep.subr.mxu0 0.0
    %367 = vmatpush1.msra.mxu0 0.0
    %368 = vmatprep.subr.mxu0 0.0
    %369 = vmatpush1.msra.mxu0 0.0
    %370 = vmatprep.subr.mxu0 0.0
    %371 = vmatpush1.msra.mxu0 0.0
    %372 = vmatprep.subr.mxu0 0.0
    %373 = vmatpush1.msra.mxu0 0.0
    %374 = vmatprep.subr.mxu0 0.0
    %375 = vmatpush1.msra.mxu0 0.0
    %376 = vmatprep.subr.mxu0 0.0
    %377 = vmatpush1.msra.mxu0 0.0
    %378 = vmatprep.subr.mxu0 0.0
    %379 = vmatpush1.msra.mxu0 0.0
    %380 = vmatprep.subr.mxu0 0.0
    %381 = vmatpush1.msra.mxu0 0.0
    %382 = vmatprep.subr.mxu0 0.0
    %383 = vmatpush1.msra.mxu0 0.0
    %384 = vmatprep.subr.mxu0 0.0
    %385 = vmatpush1.msra.mxu0 0.0
    %386 = vmatprep.subr.mxu0 0.0
    %387 = vmatpush1.msra.mxu0 0.0
    %388 = vmatprep.subr.mxu0 0.0
    %389 = vmatpush1.msra.mxu0 0.0
    %390 = vmatprep.subr.mxu0 0.0
    %391 = vmatpush1.msra.mxu0 0.0
    %392 = vmatprep.subr.mxu0 0.0
    %393 = vmatpush1.msra.mxu0 0.0
    %394 = vmatprep.mubr.f32.mxu0 0.0
    %395 = vmatmul.mubr.f32.gmra.mrb[0].mxu0 %v328
    %v396 = vpop.f32.mrb[0].mxu0
    %v397 = vadd.f32 %v161, %v396
    %v398 = vpop.f32.mrb[0].mxu0
    %399 = vdwg.mxu0
    %v400 = vmax.f32 %v397, 0.0
    %s401 = scalar_lea.vmem %s0, 4
    %v402 = vld [vmem:[%s401] sm:$0x3]
    %404 = vset.pattern.permute.xlu0 0
    %405 = vperm.xlu0 %404, %v402
    %v406 = vpop.permute.xlu0 %405
    %v408 = vmul.f32 %v406, %v66
    %v410 = vsel %vm69, %v321, 0
    %412 = vmatprep.subr.mxu0 0.0
    %413 = vmatpush1.msra.mxu0 %v37
    %414 = vmatprep.subr.mxu0 0.0
    %415 = vmatpush1.msra.mxu0 %v38
    %416 = vmatprep.subr.mxu0 0.0
    %417 = vmatpush1.msra.mxu0 %v39
    %418 = vmatprep.subr.mxu0 0.0
    %419 = vmatpush1.msra.mxu0 %v40
    %420 = vmatprep.subr.mxu0 0.0
    %421 = vmatpush1.msra.mxu0 0.0
    %422 = vmatprep.subr.mxu0 0.0
    %423 = vmatpush1.msra.mxu0 0.0
    %424 = vmatprep.subr.mxu0 0.0
    %425 = vmatpush1.msra.mxu0 0.0
    %426 = vmatprep.subr.mxu0 0.0
    %427 = vmatpush1.msra.mxu0 0.0
    %428 = vmatprep.subr.mxu0 0.0
    %429 = vmatpush1.msra.mxu0 0.0
    %430 = vmatprep.subr.mxu0 0.0
    %431 = vmatpush1.msra.mxu0 0.0
    %432 = vmatprep.subr.mxu0 0.0
    %433 = vmatpush1.msra.mxu0 0.0
    %434 = vmatprep.subr.mxu0 0.0
    %435 = vmatpush1.msra.mxu0 0.0
    %436 = vmatprep.subr.mxu0 0.0
    %437 = vmatpush1.msra.mxu0 0.0
    %438 = vmatprep.subr.mxu0 0.0
    %439 = vmatpush1.msra.mxu0 0.0
    %440 = vmatprep.subr.mxu0 0.0
    %441 = vmatpush1.msra.mxu0 0.0
    %442 = vmatprep.subr.mxu0 0.0
    %443 = vmatpush1.msra.mxu0 0.0
    %444 = vmatprep.subr.mxu0 0.0
    %445 = vmatpush1.msra.mxu0 0.0
    %446 = vmatprep.subr.mxu0 0.0
    %447 = vmatpush1.msra.mxu0 0.0
    %448 = vmatprep.subr.mxu0 0.0
    %449 = vmatpush1.msra.mxu0 0.0
    %450 = vmatprep.subr.mxu0 0.0
    %451 = vmatpush1.msra.mxu0 0.0
    %452 = vmatprep.subr.mxu0 0.0
    %453 = vmatpush1.msra.mxu0 0.0
    %454 = vmatprep.subr.mxu0 0.0
    %455 = vmatpush1.msra.mxu0 0.0
    %456 = vmatprep.subr.mxu0 0.0
    %457 = vmatpush1.msra.mxu0 0.0
    %458 = vmatprep.subr.mxu0 0.0
    %459 = vmatpush1.msra.mxu0 0.0
    %460 = vmatprep.subr.mxu0 0.0
    %461 = vmatpush1.msra.mxu0 0.0
    %462 = vmatprep.subr.mxu0 0.0
    %463 = vmatpush1.msra.mxu0 0.0
    %464 = vmatprep.subr.mxu0 0.0
    %465 = vmatpush1.msra.mxu0 0.0
    %466 = vmatprep.subr.mxu0 0.0
    %467 = vmatpush1.msra.mxu0 0.0
    %468 = vmatprep.subr.mxu0 0.0
    %469 = vmatpush1.msra.mxu0 0.0
    %470 = vmatprep.subr.mxu0 0.0
    %471 = vmatpush1.msra.mxu0 0.0
    %472 = vmatprep.subr.mxu0 0.0
    %473 = vmatpush1.msra.mxu0 0.0
    %474 = vmatprep.subr.mxu0 0.0
    %475 = vmatpush1.msra.mxu0 0.0
    %476 = vmatprep.mubr.f32.mxu0 0.0
    %477 = vmatmul.mubr.f32.gmra.mrb[0].mxu0 %v410
    %v478 = vpop.f32.mrb[0].mxu0
    %v479 = vadd.f32 0.0, %v478
    %v480 = vpop.f32.mrb[0].mxu0
    %481 = vdwg.mxu0
    %v482 = vadd.f32 %v408, %v479
    %v483 = vadd.f32 %v482, %v148
    %v484 = vmax.f32 %v483, 0.0
    %486 = vrot.lane.b32.xlu0 %v400, 32
    %v487 = vpop.permute.xlu0 %486
    %v489 = vsel %vm69, %v484, %v487
    %v491 = vsel %vm163, %v489, 0
    %493 = vmatprep.subr.mxu0 0.0
    %494 = vmatpush1.msra.mxu0 %v42
    %495 = vmatprep.subr.mxu0 0.0
    %496 = vmatpush1.msra.mxu0 %v43
    %497 = vmatprep.subr.mxu0 0.0
    %498 = vmatpush1.msra.mxu0 %v44
    %499 = vmatprep.subr.mxu0 0.0
    %500 = vmatpush1.msra.mxu0 %v45
    %501 = vmatprep.subr.mxu0 0.0
    %502 = vmatpush1.msra.mxu0 %v46
    %503 = vmatprep.subr.mxu0 0.0
    %504 = vmatpush1.msra.mxu0 %v47
    %505 = vmatprep.subr.mxu0 0.0
    %506 = vmatpush1.msra.mxu0 %v48
    %507 = vmatprep.subr.mxu0 0.0
    %508 = vmatpush1.msra.mxu0 %v49
    %509 = vmatprep.subr.mxu0 0.0
    %510 = vmatpush1.msra.mxu0 0.0
    %511 = vmatprep.subr.mxu0 0.0
    %512 = vmatpush1.msra.mxu0 0.0
    %513 = vmatprep.subr.mxu0 0.0
    %514 = vmatpush1.msra.mxu0 0.0
    %515 = vmatprep.subr.mxu0 0.0
    %516 = vmatpush1.msra.mxu0 0.0
    %517 = vmatprep.subr.mxu0 0.0
    %518 = vmatpush1.msra.mxu0 0.0
    %519 = vmatprep.subr.mxu0 0.0
    %520 = vmatpush1.msra.mxu0 0.0
    %521 = vmatprep.subr.mxu0 0.0
    %522 = vmatpush1.msra.mxu0 0.0
    %523 = vmatprep.subr.mxu0 0.0
    %524 = vmatpush1.msra.mxu0 0.0
    %525 = vmatprep.subr.mxu0 0.0
    %526 = vmatpush1.msra.mxu0 0.0
    %527 = vmatprep.subr.mxu0 0.0
    %528 = vmatpush1.msra.mxu0 0.0
    %529 = vmatprep.subr.mxu0 0.0
    %530 = vmatpush1.msra.mxu0 0.0
    %531 = vmatprep.subr.mxu0 0.0
    %532 = vmatpush1.msra.mxu0 0.0
    %533 = vmatprep.subr.mxu0 0.0
    %534 = vmatpush1.msra.mxu0 0.0
    %535 = vmatprep.subr.mxu0 0.0
    %536 = vmatpush1.msra.mxu0 0.0
    %537 = vmatprep.subr.mxu0 0.0
    %538 = vmatpush1.msra.mxu0 0.0
    %539 = vmatprep.subr.mxu0 0.0
    %540 = vmatpush1.msra.mxu0 0.0
    %541 = vmatprep.subr.mxu0 0.0
    %542 = vmatpush1.msra.mxu0 0.0
    %543 = vmatprep.subr.mxu0 0.0
    %544 = vmatpush1.msra.mxu0 0.0
    %545 = vmatprep.subr.mxu0 0.0
    %546 = vmatpush1.msra.mxu0 0.0
    %547 = vmatprep.subr.mxu0 0.0
    %548 = vmatpush1.msra.mxu0 0.0
    %549 = vmatprep.subr.mxu0 0.0
    %550 = vmatpush1.msra.mxu0 0.0
    %551 = vmatprep.subr.mxu0 0.0
    %552 = vmatpush1.msra.mxu0 0.0
    %553 = vmatprep.subr.mxu0 0.0
    %554 = vmatpush1.msra.mxu0 0.0
    %555 = vmatprep.subr.mxu0 0.0
    %556 = vmatpush1.msra.mxu0 0.0
    %557 = vmatprep.mubr.f32.mxu0 0.0
    %558 = vmatmul.mubr.f32.gmra.mrb[0].mxu0 %v491
    %v559 = vpop.f32.mrb[0].mxu0
    %v560 = vadd.f32 %v161, %v559
    %v561 = vpop.f32.mrb[0].mxu0
    %562 = vdwg.mxu0
    %v563 = vmax.f32 %v560, 0.0
    %s564 = scalar_lea.vmem %s0, 6
    %v565 = vld [vmem:[%s564] sm:$0x3]
    %567 = vset.pattern.permute.xlu0 0
    %568 = vperm.xlu0 %567, %v565
    %v569 = vpop.permute.xlu0 %568
    %v571 = vmul.f32 %v569, %v66
    %v573 = vsel %vm69, %v484, 0
    %575 = vmatprep.subr.mxu0 0.0
    %576 = vmatpush1.msra.mxu0 %v37
    %577 = vmatprep.subr.mxu0 0.0
    %578 = vmatpush1.msra.mxu0 %v38
    %579 = vmatprep.subr.mxu0 0.0
    %580 = vmatpush1.msra.mxu0 %v39
    %581 = vmatprep.subr.mxu0 0.0
    %582 = vmatpush1.msra.mxu0 %v40
    %583 = vmatprep.subr.mxu0 0.0
    %584 = vmatpush1.msra.mxu0 0.0
    %585 = vmatprep.subr.mxu0 0.0
    %586 = vmatpush1.msra.mxu0 0.0
    %587 = vmatprep.subr.mxu0 0.0
    %588 = vmatpush1.msra.mxu0 0.0
    %589 = vmatprep.subr.mxu0 0.0
    %590 = vmatpush1.msra.mxu0 0.0
    %591 = vmatprep.subr.mxu0 0.0
    %592 = vmatpush1.msra.mxu0 0.0
    %593 = vmatprep.subr.mxu0 0.0
    %594 = vmatpush1.msra.mxu0 0.0
    %595 = vmatprep.subr.mxu0 0.0
    %596 = vmatpush1.msra.mxu0 0.0
    %597 = vmatprep.subr.mxu0 0.0
    %598 = vmatpush1.msra.mxu0 0.0
    %599 = vmatprep.subr.mxu0 0.0
    %600 = vmatpush1.msra.mxu0 0.0
    %601 = vmatprep.subr.mxu0 0.0
    %602 = vmatpush1.msra.mxu0 0.0
    %603 = vmatprep.subr.mxu0 0.0
    %604 = vmatpush1.msra.mxu0 0.0
    %605 = vmatprep.subr.mxu0 0.0
    %606 = vmatpush1.msra.mxu0 0.0
    %607 = vmatprep.subr.mxu0 0.0
    %608 = vmatpush1.msra.mxu0 0.0
    %609 = vmatprep.subr.mxu0 0.0
    %610 = vmatpush1.msra.mxu0 0.0
    %611 = vmatprep.subr.mxu0 0.0
    %612 = vmatpush1.msra.mxu0 0.0
    %613 = vmatprep.subr.mxu0 0.0
    %614 = vmatpush1.msra.mxu0 0.0
    %615 = vmatprep.subr.mxu0 0.0
    %616 = vmatpush1.msra.mxu0 0.0
    %617 = vmatprep.subr.mxu0 0.0
    %618 = vmatpush1.msra.mxu0 0.0
    %619 = vmatprep.subr.mxu0 0.0
    %620 = vmatpush1.msra.mxu0 0.0
    %621 = vmatprep.subr.mxu0 0.0
    %622 = vmatpush1.msra.mxu0 0.0
    %623 = vmatprep.subr.mxu0 0.0
    %624 = vmatpush1.msra.mxu0 0.0
    %625 = vmatprep.subr.mxu0 0.0
    %626 = vmatpush1.msra.mxu0 0.0
    %627 = vmatprep.subr.mxu0 0.0
    %628 = vmatpush1.msra.mxu0 0.0
    %629 = vmatprep.subr.mxu0 0.0
    %630 = vmatpush1.msra.mxu0 0.0
    %631 = vmatprep.subr.mxu0 0.0
    %632 = vmatpush1.msra.mxu0 0.0
    %633 = vmatprep.subr.mxu0 0.0
    %634 = vmatpush1.msra.mxu0 0.0
    %635 = vmatprep.subr.mxu0 0.0
    %636 = vmatpush1.msra.mxu0 0.0
    %637 = vmatprep.subr.mxu0 0.0
    %638 = vmatpush1.msra.mxu0 0.0
    %639 = vmatprep.mubr.f32.mxu0 0.0
    %640 = vmatmul.mubr.f32.gmra.mrb[0].mxu0 %v573
    %v641 = vpop.f32.mrb[0].mxu0
    %v642 = vadd.f32 0.0, %v641
    %v643 = vpop.f32.mrb[0].mxu0
    %644 = vdwg.mxu0
    %v645 = vadd.f32 %v571, %v642
    %v646 = vadd.f32 %v645, %v148
    %v647 = vmax.f32 %v646, 0.0
    %649 = vrot.lane.b32.xlu0 %v563, 32
    %v650 = vpop.permute.xlu0 %649
    %v652 = vsel %vm69, %v647, %v650
    %v654 = vsel %vm163, %v652, 0
    %656 = vmatprep.subr.mxu0 0.0
    %657 = vmatpush1.msra.mxu0 %v42
    %658 = vmatprep.subr.mxu0 0.0
    %659 = vmatpush1.msra.mxu0 %v43
    %660 = vmatprep.subr.mxu0 0.0
    %661 = vmatpush1.msra.mxu0 %v44
    %662 = vmatprep.subr.mxu0 0.0
    %663 = vmatpush1.msra.mxu0 %v45
    %664 = vmatprep.subr.mxu0 0.0
    %665 = vmatpush1.msra.mxu0 %v46
    %666 = vmatprep.subr.mxu0 0.0
    %667 = vmatpush1.msra.mxu0 %v47
    %668 = vmatprep.subr.mxu0 0.0
    %669 = vmatpush1.msra.mxu0 %v48
    %670 = vmatprep.subr.mxu0 0.0
    %671 = vmatpush1.msra.mxu0 %v49
    %672 = vmatprep.subr.mxu0 0.0
    %673 = vmatpush1.msra.mxu0 0.0
    %674 = vmatprep.subr.mxu0 0.0
    %675 = vmatpush1.msra.mxu0 0.0
    %676 = vmatprep.subr.mxu0 0.0
    %677 = vmatpush1.msra.mxu0 0.0
    %678 = vmatprep.subr.mxu0 0.0
    %679 = vmatpush1.msra.mxu0 0.0
    %680 = vmatprep.subr.mxu0 0.0
    %681 = vmatpush1.msra.mxu0 0.0
    %682 = vmatprep.subr.mxu0 0.0
    %683 = vmatpush1.msra.mxu0 0.0
    %684 = vmatprep.subr.mxu0 0.0
    %685 = vmatpush1.msra.mxu0 0.0
    %686 = vmatprep.subr.mxu0 0.0
    %687 = vmatpush1.msra.mxu0 0.0
    %688 = vmatprep.subr.mxu0 0.0
    %689 = vmatpush1.msra.mxu0 0.0
    %690 = vmatprep.subr.mxu0 0.0
    %691 = vmatpush1.msra.mxu0 0.0
    %692 = vmatprep.subr.mxu0 0.0
    %693 = vmatpush1.msra.mxu0 0.0
    %694 = vmatprep.subr.mxu0 0.0
    %695 = vmatpush1.msra.mxu0 0.0
    %696 = vmatprep.subr.mxu0 0.0
    %697 = vmatpush1.msra.mxu0 0.0
    %698 = vmatprep.subr.mxu0 0.0
    %699 = vmatpush1.msra.mxu0 0.0
    %700 = vmatprep.subr.mxu0 0.0
    %701 = vmatpush1.msra.mxu0 0.0
    %702 = vmatprep.subr.mxu0 0.0
    %703 = vmatpush1.msra.mxu0 0.0
    %704 = vmatprep.subr.mxu0 0.0
    %705 = vmatpush1.msra.mxu0 0.0
    %706 = vmatprep.subr.mxu0 0.0
    %707 = vmatpush1.msra.mxu0 0.0
    %708 = vmatprep.subr.mxu0 0.0
    %709 = vmatpush1.msra.mxu0 0.0
    %710 = vmatprep.subr.mxu0 0.0
    %711 = vmatpush1.msra.mxu0 0.0
    %712 = vmatprep.subr.mxu0 0.0
    %713 = vmatpush1.msra.mxu0 0.0
    %714 = vmatprep.subr.mxu0 0.0
    %715 = vmatpush1.msra.mxu0 0.0
    %716 = vmatprep.subr.mxu0 0.0
    %717 = vmatpush1.msra.mxu0 0.0
    %718 = vmatprep.subr.mxu0 0.0
    %719 = vmatpush1.msra.mxu0 0.0
    %720 = vmatprep.mubr.f32.mxu0 0.0
    %721 = vmatmul.mubr.f32.gmra.mrb[0].mxu0 %v654
    %v722 = vpop.f32.mrb[0].mxu0
    %v723 = vadd.f32 %v161, %v722
    %v724 = vpop.f32.mrb[0].mxu0
    %725 = vdwg.mxu0
    %v726 = vmax.f32 %v723, 0.0
    %s727 = scalar_lea.vmem %s0, 8
    %v728 = vld [vmem:[%s727] sm:$0x3]
    %730 = vset.pattern.permute.xlu0 0
    %731 = vperm.xlu0 %730, %v728
    %v732 = vpop.permute.xlu0 %731
    %v734 = vmul.f32 %v732, %v66
    %v736 = vsel %vm69, %v647, 0
    %738 = vmatprep.subr.mxu0 0.0
    %739 = vmatpush1.msra.mxu0 %v37
    %740 = vmatprep.subr.mxu0 0.0
    %741 = vmatpush1.msra.mxu0 %v38
    %742 = vmatprep.subr.mxu0 0.0
    %743 = vmatpush1.msra.mxu0 %v39
    %744 = vmatprep.subr.mxu0 0.0
    %745 = vmatpush1.msra.mxu0 %v40
    %746 = vmatprep.subr.mxu0 0.0
    %747 = vmatpush1.msra.mxu0 0.0
    %748 = vmatprep.subr.mxu0 0.0
    %749 = vmatpush1.msra.mxu0 0.0
    %750 = vmatprep.subr.mxu0 0.0
    %751 = vmatpush1.msra.mxu0 0.0
    %752 = vmatprep.subr.mxu0 0.0
    %753 = vmatpush1.msra.mxu0 0.0
    %754 = vmatprep.subr.mxu0 0.0
    %755 = vmatpush1.msra.mxu0 0.0
    %756 = vmatprep.subr.mxu0 0.0
    %757 = vmatpush1.msra.mxu0 0.0
    %758 = vmatprep.subr.mxu0 0.0
    %759 = vmatpush1.msra.mxu0 0.0
    %760 = vmatprep.subr.mxu0 0.0
    %761 = vmatpush1.msra.mxu0 0.0
    %762 = vmatprep.subr.mxu0 0.0
    %763 = vmatpush1.msra.mxu0 0.0
    %764 = vmatprep.subr.mxu0 0.0
    %765 = vmatpush1.msra.mxu0 0.0
    %766 = vmatprep.subr.mxu0 0.0
    %767 = vmatpush1.msra.mxu0 0.0
    %768 = vmatprep.subr.mxu0 0.0
    %769 = vmatpush1.msra.mxu0 0.0
    %770 = vmatprep.subr.mxu0 0.0
    %771 = vmatpush1.msra.mxu0 0.0
    %772 = vmatprep.subr.mxu0 0.0
    %773 = vmatpush1.msra.mxu0 0.0
    %774 = vmatprep.subr.mxu0 0.0
    %775 = vmatpush1.msra.mxu0 0.0
    %776 = vmatprep.subr.mxu0 0.0
    %777 = vmatpush1.msra.mxu0 0.0
    %778 = vmatprep.subr.mxu0 0.0
    %779 = vmatpush1.msra.mxu0 0.0
    %780 = vmatprep.subr.mxu0 0.0
    %781 = vmatpush1.msra.mxu0 0.0
    %782 = vmatprep.subr.mxu0 0.0
    %783 = vmatpush1.msra.mxu0 0.0
    %784 = vmatprep.subr.mxu0 0.0
    %785 = vmatpush1.msra.mxu0 0.0
    %786 = vmatprep.subr.mxu0 0.0
    %787 = vmatpush1.msra.mxu0 0.0
    %788 = vmatprep.subr.mxu0 0.0
    %789 = vmatpush1.msra.mxu0 0.0
    %790 = vmatprep.subr.mxu0 0.0
    %791 = vmatpush1.msra.mxu0 0.0
    %792 = vmatprep.subr.mxu0 0.0
    %793 = vmatpush1.msra.mxu0 0.0
    %794 = vmatprep.subr.mxu0 0.0
    %795 = vmatpush1.msra.mxu0 0.0
    %796 = vmatprep.subr.mxu0 0.0
    %797 = vmatpush1.msra.mxu0 0.0
    %798 = vmatprep.subr.mxu0 0.0
    %799 = vmatpush1.msra.mxu0 0.0
    %800 = vmatprep.subr.mxu0 0.0
    %801 = vmatpush1.msra.mxu0 0.0
    %802 = vmatprep.mubr.f32.mxu0 0.0
    %803 = vmatmul.mubr.f32.gmra.mrb[0].mxu0 %v736
    %v804 = vpop.f32.mrb[0].mxu0
    %v805 = vadd.f32 0.0, %v804
    %v806 = vpop.f32.mrb[0].mxu0
    %807 = vdwg.mxu0
    %v808 = vadd.f32 %v734, %v805
    %v809 = vadd.f32 %v808, %v148
    %v810 = vmax.f32 %v809, 0.0
    %812 = vrot.lane.b32.xlu0 %v726, 32
    %v813 = vpop.permute.xlu0 %812
    %v815 = vsel %vm69, %v810, %v813
    %v817 = vsel %vm163, %v815, 0
    %819 = vmatprep.subr.mxu0 0.0
    %820 = vmatpush1.msra.mxu0 %v42
    %821 = vmatprep.subr.mxu0 0.0
    %822 = vmatpush1.msra.mxu0 %v43
    %823 = vmatprep.subr.mxu0 0.0
    %824 = vmatpush1.msra.mxu0 %v44
    %825 = vmatprep.subr.mxu0 0.0
    %826 = vmatpush1.msra.mxu0 %v45
    %827 = vmatprep.subr.mxu0 0.0
    %828 = vmatpush1.msra.mxu0 %v46
    %829 = vmatprep.subr.mxu0 0.0
    %830 = vmatpush1.msra.mxu0 %v47
    %831 = vmatprep.subr.mxu0 0.0
    %832 = vmatpush1.msra.mxu0 %v48
    %833 = vmatprep.subr.mxu0 0.0
    %834 = vmatpush1.msra.mxu0 %v49
    %835 = vmatprep.subr.mxu0 0.0
    %836 = vmatpush1.msra.mxu0 0.0
    %837 = vmatprep.subr.mxu0 0.0
    %838 = vmatpush1.msra.mxu0 0.0
    %839 = vmatprep.subr.mxu0 0.0
    %840 = vmatpush1.msra.mxu0 0.0
    %841 = vmatprep.subr.mxu0 0.0
    %842 = vmatpush1.msra.mxu0 0.0
    %843 = vmatprep.subr.mxu0 0.0
    %844 = vmatpush1.msra.mxu0 0.0
    %845 = vmatprep.subr.mxu0 0.0
    %846 = vmatpush1.msra.mxu0 0.0
    %847 = vmatprep.subr.mxu0 0.0
    %848 = vmatpush1.msra.mxu0 0.0
    %849 = vmatprep.subr.mxu0 0.0
    %850 = vmatpush1.msra.mxu0 0.0
    %851 = vmatprep.subr.mxu0 0.0
    %852 = vmatpush1.msra.mxu0 0.0
    %853 = vmatprep.subr.mxu0 0.0
    %854 = vmatpush1.msra.mxu0 0.0
    %855 = vmatprep.subr.mxu0 0.0
    %856 = vmatpush1.msra.mxu0 0.0
    %857 = vmatprep.subr.mxu0 0.0
    %858 = vmatpush1.msra.mxu0 0.0
    %859 = vmatprep.subr.mxu0 0.0
    %860 = vmatpush1.msra.mxu0 0.0
    %861 = vmatprep.subr.mxu0 0.0
    %862 = vmatpush1.msra.mxu0 0.0
    %863 = vmatprep.subr.mxu0 0.0
    %864 = vmatpush1.msra.mxu0 0.0
    %865 = vmatprep.subr.mxu0 0.0
    %866 = vmatpush1.msra.mxu0 0.0
    %867 = vmatprep.subr.mxu0 0.0
    %868 = vmatpush1.msra.mxu0 0.0
    %869 = vmatprep.subr.mxu0 0.0
    %870 = vmatpush1.msra.mxu0 0.0
    %871 = vmatprep.subr.mxu0 0.0
    %872 = vmatpush1.msra.mxu0 0.0
    %873 = vmatprep.subr.mxu0 0.0
    %874 = vmatpush1.msra.mxu0 0.0
    %875 = vmatprep.subr.mxu0 0.0
    %876 = vmatpush1.msra.mxu0 0.0
    %877 = vmatprep.subr.mxu0 0.0
    %878 = vmatpush1.msra.mxu0 0.0
    %879 = vmatprep.subr.mxu0 0.0
    %880 = vmatpush1.msra.mxu0 0.0
    %881 = vmatprep.subr.mxu0 0.0
    %882 = vmatpush1.msra.mxu0 0.0
    %883 = vmatprep.mubr.f32.mxu0 0.0
    %884 = vmatmul.mubr.f32.gmra.mrb[0].mxu0 %v817
    %v885 = vpop.f32.mrb[0].mxu0
    %v886 = vadd.f32 %v161, %v885
    %v887 = vpop.f32.mrb[0].mxu0
    %888 = vdwg.mxu0
    %v889 = vmax.f32 %v886, 0.0
    %s890 = scalar_lea.vmem %s0, 10
    %v891 = vld [vmem:[%s890] sm:$0x3]
    %893 = vset.pattern.permute.xlu0 0
    %894 = vperm.xlu0 %893, %v891
    %v895 = vpop.permute.xlu0 %894
    %v897 = vmul.f32 %v895, %v66
    %v899 = vsel %vm69, %v810, 0
    %901 = vmatprep.subr.mxu0 0.0
    %902 = vmatpush1.msra.mxu0 %v37
    %903 = vmatprep.subr.mxu0 0.0
    %904 = vmatpush1.msra.mxu0 %v38
    %905 = vmatprep.subr.mxu0 0.0
    %906 = vmatpush1.msra.mxu0 %v39
    %907 = vmatprep.subr.mxu0 0.0
    %908 = vmatpush1.msra.mxu0 %v40
    %909 = vmatprep.subr.mxu0 0.0
    %910 = vmatpush1.msra.mxu0 0.0
    %911 = vmatprep.subr.mxu0 0.0
    %912 = vmatpush1.msra.mxu0 0.0
    %913 = vmatprep.subr.mxu0 0.0
    %914 = vmatpush1.msra.mxu0 0.0
    %915 = vmatprep.subr.mxu0 0.0
    %916 = vmatpush1.msra.mxu0 0.0
    %917 = vmatprep.subr.mxu0 0.0
    %918 = vmatpush1.msra.mxu0 0.0
    %919 = vmatprep.subr.mxu0 0.0
    %920 = vmatpush1.msra.mxu0 0.0
    %921 = vmatprep.subr.mxu0 0.0
    %922 = vmatpush1.msra.mxu0 0.0
    %923 = vmatprep.subr.mxu0 0.0
    %924 = vmatpush1.msra.mxu0 0.0
    %925 = vmatprep.subr.mxu0 0.0
    %926 = vmatpush1.msra.mxu0 0.0
    %927 = vmatprep.subr.mxu0 0.0
    %928 = vmatpush1.msra.mxu0 0.0
    %929 = vmatprep.subr.mxu0 0.0
    %930 = vmatpush1.msra.mxu0 0.0
    %931 = vmatprep.subr.mxu0 0.0
    %932 = vmatpush1.msra.mxu0 0.0
    %933 = vmatprep.subr.mxu0 0.0
    %934 = vmatpush1.msra.mxu0 0.0
    %935 = vmatprep.subr.mxu0 0.0
    %936 = vmatpush1.msra.mxu0 0.0
    %937 = vmatprep.subr.mxu0 0.0
    %938 = vmatpush1.msra.mxu0 0.0
    %939 = vmatprep.subr.mxu0 0.0
    %940 = vmatpush1.msra.mxu0 0.0
    %941 = vmatprep.subr.mxu0 0.0
    %942 = vmatpush1.msra.mxu0 0.0
    %943 = vmatprep.subr.mxu0 0.0
    %944 = vmatpush1.msra.mxu0 0.0
    %945 = vmatprep.subr.mxu0 0.0
    %946 = vmatpush1.msra.mxu0 0.0
    %947 = vmatprep.subr.mxu0 0.0
    %948 = vmatpush1.msra.mxu0 0.0
    %949 = vmatprep.subr.mxu0 0.0
    %950 = vmatpush1.msra.mxu0 0.0
    %951 = vmatprep.subr.mxu0 0.0
    %952 = vmatpush1.msra.mxu0 0.0
    %953 = vmatprep.subr.mxu0 0.0
    %954 = vmatpush1.msra.mxu0 0.0
    %955 = vmatprep.subr.mxu0 0.0
    %956 = vmatpush1.msra.mxu0 0.0
    %957 = vmatprep.subr.mxu0 0.0
    %958 = vmatpush1.msra.mxu0 0.0
    %959 = vmatprep.subr.mxu0 0.0
    %960 = vmatpush1.msra.mxu0 0.0
    %961 = vmatprep.subr.mxu0 0.0
    %962 = vmatpush1.msra.mxu0 0.0
    %963 = vmatprep.subr.mxu0 0.0
    %964 = vmatpush1.msra.mxu0 0.0
    %965 = vmatprep.mubr.f32.mxu0 0.0
    %966 = vmatmul.mubr.f32.gmra.mrb[0].mxu0 %v899
    %v967 = vpop.f32.mrb[0].mxu0
    %v968 = vadd.f32 0.0, %v967
    %v969 = vpop.f32.mrb[0].mxu0
    %970 = vdwg.mxu0
    %v971 = vadd.f32 %v897, %v968
    %v972 = vadd.f32 %v971, %v148
    %v973 = vmax.f32 %v972, 0.0
    %975 = vrot.lane.b32.xlu0 %v889, 32
    %v976 = vpop.permute.xlu0 %975
    %v978 = vsel %vm69, %v973, %v976
    %v980 = vsel %vm163, %v978, 0
    %982 = vmatprep.subr.mxu0 0.0
    %983 = vmatpush1.msra.mxu0 %v42
    %984 = vmatprep.subr.mxu0 0.0
    %985 = vmatpush1.msra.mxu0 %v43
    %986 = vmatprep.subr.mxu0 0.0
    %987 = vmatpush1.msra.mxu0 %v44
    %988 = vmatprep.subr.mxu0 0.0
    %989 = vmatpush1.msra.mxu0 %v45
    %990 = vmatprep.subr.mxu0 0.0
    %991 = vmatpush1.msra.mxu0 %v46
    %992 = vmatprep.subr.mxu0 0.0
    %993 = vmatpush1.msra.mxu0 %v47
    %994 = vmatprep.subr.mxu0 0.0
    %995 = vmatpush1.msra.mxu0 %v48
    %996 = vmatprep.subr.mxu0 0.0
    %997 = vmatpush1.msra.mxu0 %v49
    %998 = vmatprep.subr.mxu0 0.0
    %999 = vmatpush1.msra.mxu0 0.0
    %1000 = vmatprep.subr.mxu0 0.0
    %1001 = vmatpush1.msra.mxu0 0.0
    %1002 = vmatprep.subr.mxu0 0.0
    %1003 = vmatpush1.msra.mxu0 0.0
    %1004 = vmatprep.subr.mxu0 0.0
    %1005 = vmatpush1.msra.mxu0 0.0
    %1006 = vmatprep.subr.mxu0 0.0
    %1007 = vmatpush1.msra.mxu0 0.0
    %1008 = vmatprep.subr.mxu0 0.0
    %1009 = vmatpush1.msra.mxu0 0.0
    %1010 = vmatprep.subr.mxu0 0.0
    %1011 = vmatpush1.msra.mxu0 0.0
    %1012 = vmatprep.subr.mxu0 0.0
    %1013 = vmatpush1.msra.mxu0 0.0
    %1014 = vmatprep.subr.mxu0 0.0
    %1015 = vmatpush1.msra.mxu0 0.0
    %1016 = vmatprep.subr.mxu0 0.0
    %1017 = vmatpush1.msra.mxu0 0.0
    %1018 = vmatprep.subr.mxu0 0.0
    %1019 = vmatpush1.msra.mxu0 0.0
    %1020 = vmatprep.subr.mxu0 0.0
    %1021 = vmatpush1.msra.mxu0 0.0
    %1022 = vmatprep.subr.mxu0 0.0
    %1023 = vmatpush1.msra.mxu0 0.0
    %1024 = vmatprep.subr.mxu0 0.0
    %1025 = vmatpush1.msra.mxu0 0.0
    %1026 = vmatprep.subr.mxu0 0.0
    %1027 = vmatpush1.msra.mxu0 0.0
    %1028 = vmatprep.subr.mxu0 0.0
    %1029 = vmatpush1.msra.mxu0 0.0
    %1030 = vmatprep.subr.mxu0 0.0
    %1031 = vmatpush1.msra.mxu0 0.0
    %1032 = vmatprep.subr.mxu0 0.0
    %1033 = vmatpush1.msra.mxu0 0.0
    %1034 = vmatprep.subr.mxu0 0.0
    %1035 = vmatpush1.msra.mxu0 0.0
    %1036 = vmatprep.subr.mxu0 0.0
    %1037 = vmatpush1.msra.mxu0 0.0
    %1038 = vmatprep.subr.mxu0 0.0
    %1039 = vmatpush1.msra.mxu0 0.0
    %1040 = vmatprep.subr.mxu0 0.0
    %1041 = vmatpush1.msra.mxu0 0.0
    %1042 = vmatprep.subr.mxu0 0.0
    %1043 = vmatpush1.msra.mxu0 0.0
    %1044 = vmatprep.subr.mxu0 0.0
    %1045 = vmatpush1.msra.mxu0 0.0
    %1046 = vmatprep.mubr.f32.mxu0 0.0
    %1047 = vmatmul.mubr.f32.gmra.mrb[0].mxu0 %v980
    %v1048 = vpop.f32.mrb[0].mxu0
    %v1049 = vadd.f32 %v161, %v1048
    %v1050 = vpop.f32.mrb[0].mxu0
    %1051 = vdwg.mxu0
    %v1052 = vmax.f32 %v1049, 0.0
    %s1053 = scalar_lea.vmem %s0, 12
    %v1054 = vld [vmem:[%s1053] sm:$0x3]
    %1056 = vset.pattern.permute.xlu0 0
    %1057 = vperm.xlu0 %1056, %v1054
    %v1058 = vpop.permute.xlu0 %1057
    %v1060 = vmul.f32 %v1058, %v66
    %v1062 = vsel %vm69, %v973, 0
    %1064 = vmatprep.subr.mxu0 0.0
    %1065 = vmatpush1.msra.mxu0 %v37
    %1066 = vmatprep.subr.mxu0 0.0
    %1067 = vmatpush1.msra.mxu0 %v38
    %1068 = vmatprep.subr.mxu0 0.0
    %1069 = vmatpush1.msra.mxu0 %v39
    %1070 = vmatprep.subr.mxu0 0.0
    %1071 = vmatpush1.msra.mxu0 %v40
    %1072 = vmatprep.subr.mxu0 0.0
    %1073 = vmatpush1.msra.mxu0 0.0
    %1074 = vmatprep.subr.mxu0 0.0
    %1075 = vmatpush1.msra.mxu0 0.0
    %1076 = vmatprep.subr.mxu0 0.0
    %1077 = vmatpush1.msra.mxu0 0.0
    %1078 = vmatprep.subr.mxu0 0.0
    %1079 = vmatpush1.msra.mxu0 0.0
    %1080 = vmatprep.subr.mxu0 0.0
    %1081 = vmatpush1.msra.mxu0 0.0
    %1082 = vmatprep.subr.mxu0 0.0
    %1083 = vmatpush1.msra.mxu0 0.0
    %1084 = vmatprep.subr.mxu0 0.0
    %1085 = vmatpush1.msra.mxu0 0.0
    %1086 = vmatprep.subr.mxu0 0.0
    %1087 = vmatpush1.msra.mxu0 0.0
    %1088 = vmatprep.subr.mxu0 0.0
    %1089 = vmatpush1.msra.mxu0 0.0
    %1090 = vmatprep.subr.mxu0 0.0
    %1091 = vmatpush1.msra.mxu0 0.0
    %1092 = vmatprep.subr.mxu0 0.0
    %1093 = vmatpush1.msra.mxu0 0.0
    %1094 = vmatprep.subr.mxu0 0.0
    %1095 = vmatpush1.msra.mxu0 0.0
    %1096 = vmatprep.subr.mxu0 0.0
    %1097 = vmatpush1.msra.mxu0 0.0
    %1098 = vmatprep.subr.mxu0 0.0
    %1099 = vmatpush1.msra.mxu0 0.0
    %1100 = vmatprep.subr.mxu0 0.0
    %1101 = vmatpush1.msra.mxu0 0.0
    %1102 = vmatprep.subr.mxu0 0.0
    %1103 = vmatpush1.msra.mxu0 0.0
    %1104 = vmatprep.subr.mxu0 0.0
    %1105 = vmatpush1.msra.mxu0 0.0
    %1106 = vmatprep.subr.mxu0 0.0
    %1107 = vmatpush1.msra.mxu0 0.0
    %1108 = vmatprep.subr.mxu0 0.0
    %1109 = vmatpush1.msra.mxu0 0.0
    %1110 = vmatprep.subr.mxu0 0.0
    %1111 = vmatpush1.msra.mxu0 0.0
    %1112 = vmatprep.subr.mxu0 0.0
    %1113 = vmatpush1.msra.mxu0 0.0
    %1114 = vmatprep.subr.mxu0 0.0
    %1115 = vmatpush1.msra.mxu0 0.0
    %1116 = vmatprep.subr.mxu0 0.0
    %1117 = vmatpush1.msra.mxu0 0.0
    %1118 = vmatprep.subr.mxu0 0.0
    %1119 = vmatpush1.msra.mxu0 0.0
    %1120 = vmatprep.subr.mxu0 0.0
    %1121 = vmatpush1.msra.mxu0 0.0
    %1122 = vmatprep.subr.mxu0 0.0
    %1123 = vmatpush1.msra.mxu0 0.0
    %1124 = vmatprep.subr.mxu0 0.0
    %1125 = vmatpush1.msra.mxu0 0.0
    %1126 = vmatprep.subr.mxu0 0.0
    %1127 = vmatpush1.msra.mxu0 0.0
    %1128 = vmatprep.mubr.f32.mxu0 0.0
    %1129 = vmatmul.mubr.f32.gmra.mrb[0].mxu0 %v1062
    %v1130 = vpop.f32.mrb[0].mxu0
    %v1131 = vadd.f32 0.0, %v1130
    %v1132 = vpop.f32.mrb[0].mxu0
    %1133 = vdwg.mxu0
    %v1134 = vadd.f32 %v1060, %v1131
    %v1135 = vadd.f32 %v1134, %v148
    %v1136 = vmax.f32 %v1135, 0.0
    %1138 = vrot.lane.b32.xlu0 %v1052, 32
    %v1139 = vpop.permute.xlu0 %1138
    %v1141 = vsel %vm69, %v1136, %v1139
    %v1143 = vsel %vm163, %v1141, 0
    %1145 = vmatprep.subr.mxu0 0.0
    %1146 = vmatpush1.msra.mxu0 %v42
    %1147 = vmatprep.subr.mxu0 0.0
    %1148 = vmatpush1.msra.mxu0 %v43
    %1149 = vmatprep.subr.mxu0 0.0
    %1150 = vmatpush1.msra.mxu0 %v44
    %1151 = vmatprep.subr.mxu0 0.0
    %1152 = vmatpush1.msra.mxu0 %v45
    %1153 = vmatprep.subr.mxu0 0.0
    %1154 = vmatpush1.msra.mxu0 %v46
    %1155 = vmatprep.subr.mxu0 0.0
    %1156 = vmatpush1.msra.mxu0 %v47
    %1157 = vmatprep.subr.mxu0 0.0
    %1158 = vmatpush1.msra.mxu0 %v48
    %1159 = vmatprep.subr.mxu0 0.0
    %1160 = vmatpush1.msra.mxu0 %v49
    %1161 = vmatprep.subr.mxu0 0.0
    %1162 = vmatpush1.msra.mxu0 0.0
    %1163 = vmatprep.subr.mxu0 0.0
    %1164 = vmatpush1.msra.mxu0 0.0
    %1165 = vmatprep.subr.mxu0 0.0
    %1166 = vmatpush1.msra.mxu0 0.0
    %1167 = vmatprep.subr.mxu0 0.0
    %1168 = vmatpush1.msra.mxu0 0.0
    %1169 = vmatprep.subr.mxu0 0.0
    %1170 = vmatpush1.msra.mxu0 0.0
    %1171 = vmatprep.subr.mxu0 0.0
    %1172 = vmatpush1.msra.mxu0 0.0
    %1173 = vmatprep.subr.mxu0 0.0
    %1174 = vmatpush1.msra.mxu0 0.0
    %1175 = vmatprep.subr.mxu0 0.0
    %1176 = vmatpush1.msra.mxu0 0.0
    %1177 = vmatprep.subr.mxu0 0.0
    %1178 = vmatpush1.msra.mxu0 0.0
    %1179 = vmatprep.subr.mxu0 0.0
    %1180 = vmatpush1.msra.mxu0 0.0
    %1181 = vmatprep.subr.mxu0 0.0
    %1182 = vmatpush1.msra.mxu0 0.0
    %1183 = vmatprep.subr.mxu0 0.0
    %1184 = vmatpush1.msra.mxu0 0.0
    %1185 = vmatprep.subr.mxu0 0.0
    %1186 = vmatpush1.msra.mxu0 0.0
    %1187 = vmatprep.subr.mxu0 0.0
    %1188 = vmatpush1.msra.mxu0 0.0
    %1189 = vmatprep.subr.mxu0 0.0
    %1190 = vmatpush1.msra.mxu0 0.0
    %1191 = vmatprep.subr.mxu0 0.0
    %1192 = vmatpush1.msra.mxu0 0.0
    %1193 = vmatprep.subr.mxu0 0.0
    %1194 = vmatpush1.msra.mxu0 0.0
    %1195 = vmatprep.subr.mxu0 0.0
    %1196 = vmatpush1.msra.mxu0 0.0
    %1197 = vmatprep.subr.mxu0 0.0
    %1198 = vmatpush1.msra.mxu0 0.0
    %1199 = vmatprep.subr.mxu0 0.0
    %1200 = vmatpush1.msra.mxu0 0.0
    %1201 = vmatprep.subr.mxu0 0.0
    %1202 = vmatpush1.msra.mxu0 0.0
    %1203 = vmatprep.subr.mxu0 0.0
    %1204 = vmatpush1.msra.mxu0 0.0
    %1205 = vmatprep.subr.mxu0 0.0
    %1206 = vmatpush1.msra.mxu0 0.0
    %1207 = vmatprep.subr.mxu0 0.0
    %1208 = vmatpush1.msra.mxu0 0.0
    %1209 = vmatprep.mubr.f32.mxu0 0.0
    %1210 = vmatmul.mubr.f32.gmra.mrb[0].mxu0 %v1143
    %v1211 = vpop.f32.mrb[0].mxu0
    %v1212 = vadd.f32 %v161, %v1211
    %v1213 = vpop.f32.mrb[0].mxu0
    %1214 = vdwg.mxu0
    %v1215 = vmax.f32 %v1212, 0.0
    %s1216 = scalar_lea.vmem %s0, 14
    %v1217 = vld [vmem:[%s1216] sm:$0x3]
    %1219 = vset.pattern.permute.xlu0 0
    %1220 = vperm.xlu0 %1219, %v1217
    %v1221 = vpop.permute.xlu0 %1220
    %v1223 = vmul.f32 %v1221, %v66
    %v1225 = vsel %vm69, %v1136, 0
    %1227 = vmatprep.subr.mxu0 0.0
    %1228 = vmatpush1.msra.mxu0 %v37
    %1229 = vmatprep.subr.mxu0 0.0
    %1230 = vmatpush1.msra.mxu0 %v38
    %1231 = vmatprep.subr.mxu0 0.0
    %1232 = vmatpush1.msra.mxu0 %v39
    %1233 = vmatprep.subr.mxu0 0.0
    %1234 = vmatpush1.msra.mxu0 %v40
    %1235 = vmatprep.subr.mxu0 0.0
    %1236 = vmatpush1.msra.mxu0 0.0
    %1237 = vmatprep.subr.mxu0 0.0
    %1238 = vmatpush1.msra.mxu0 0.0
    %1239 = vmatprep.subr.mxu0 0.0
    %1240 = vmatpush1.msra.mxu0 0.0
    %1241 = vmatprep.subr.mxu0 0.0
    %1242 = vmatpush1.msra.mxu0 0.0
    %1243 = vmatprep.subr.mxu0 0.0
    %1244 = vmatpush1.msra.mxu0 0.0
    %1245 = vmatprep.subr.mxu0 0.0
    %1246 = vmatpush1.msra.mxu0 0.0
    %1247 = vmatprep.subr.mxu0 0.0
    %1248 = vmatpush1.msra.mxu0 0.0
    %1249 = vmatprep.subr.mxu0 0.0
    %1250 = vmatpush1.msra.mxu0 0.0
    %1251 = vmatprep.subr.mxu0 0.0
    %1252 = vmatpush1.msra.mxu0 0.0
    %1253 = vmatprep.subr.mxu0 0.0
    %1254 = vmatpush1.msra.mxu0 0.0
    %1255 = vmatprep.subr.mxu0 0.0
    %1256 = vmatpush1.msra.mxu0 0.0
    %1257 = vmatprep.subr.mxu0 0.0
    %1258 = vmatpush1.msra.mxu0 0.0
    %1259 = vmatprep.subr.mxu0 0.0
    %1260 = vmatpush1.msra.mxu0 0.0
    %1261 = vmatprep.subr.mxu0 0.0
    %1262 = vmatpush1.msra.mxu0 0.0
    %1263 = vmatprep.subr.mxu0 0.0
    %1264 = vmatpush1.msra.mxu0 0.0
    %1265 = vmatprep.subr.mxu0 0.0
    %1266 = vmatpush1.msra.mxu0 0.0
    %1267 = vmatprep.subr.mxu0 0.0
    %1268 = vmatpush1.msra.mxu0 0.0
    %1269 = vmatprep.subr.mxu0 0.0
    %1270 = vmatpush1.msra.mxu0 0.0
    %1271 = vmatprep.subr.mxu0 0.0
    %1272 = vmatpush1.msra.mxu0 0.0
    %1273 = vmatprep.subr.mxu0 0.0
    %1274 = vmatpush1.msra.mxu0 0.0
    %1275 = vmatprep.subr.mxu0 0.0
    %1276 = vmatpush1.msra.mxu0 0.0
    %1277 = vmatprep.subr.mxu0 0.0
    %1278 = vmatpush1.msra.mxu0 0.0
    %1279 = vmatprep.subr.mxu0 0.0
    %1280 = vmatpush1.msra.mxu0 0.0
    %1281 = vmatprep.subr.mxu0 0.0
    %1282 = vmatpush1.msra.mxu0 0.0
    %1283 = vmatprep.subr.mxu0 0.0
    %1284 = vmatpush1.msra.mxu0 0.0
    %1285 = vmatprep.subr.mxu0 0.0
    %1286 = vmatpush1.msra.mxu0 0.0
    %1287 = vmatprep.subr.mxu0 0.0
    %1288 = vmatpush1.msra.mxu0 0.0
    %1289 = vmatprep.subr.mxu0 0.0
    %1290 = vmatpush1.msra.mxu0 0.0
    %1291 = vmatprep.mubr.f32.mxu0 0.0
    %1292 = vmatmul.mubr.f32.gmra.mrb[0].mxu0 %v1225
    %v1293 = vpop.f32.mrb[0].mxu0
    %v1294 = vadd.f32 0.0, %v1293
    %v1295 = vpop.f32.mrb[0].mxu0
    %1296 = vdwg.mxu0
    %v1297 = vadd.f32 %v1223, %v1294
    %v1298 = vadd.f32 %v1297, %v148
    %v1299 = vmax.f32 %v1298, 0.0
    %1301 = vrot.lane.b32.xlu0 %v1215, 32
    %v1302 = vpop.permute.xlu0 %1301
    %v1304 = vsel %vm69, %v1299, %v1302
    %v1306 = vsel %vm163, %v1304, 0
    %1308 = vmatprep.subr.mxu0 0.0
    %1309 = vmatpush1.msra.mxu0 %v42
    %1310 = vmatprep.subr.mxu0 0.0
    %1311 = vmatpush1.msra.mxu0 %v43
    %1312 = vmatprep.subr.mxu0 0.0
    %1313 = vmatpush1.msra.mxu0 %v44
    %1314 = vmatprep.subr.mxu0 0.0
    %1315 = vmatpush1.msra.mxu0 %v45
    %1316 = vmatprep.subr.mxu0 0.0
    %1317 = vmatpush1.msra.mxu0 %v46
    %1318 = vmatprep.subr.mxu0 0.0
    %1319 = vmatpush1.msra.mxu0 %v47
    %1320 = vmatprep.subr.mxu0 0.0
    %1321 = vmatpush1.msra.mxu0 %v48
    %1322 = vmatprep.subr.mxu0 0.0
    %1323 = vmatpush1.msra.mxu0 %v49
    %1324 = vmatprep.subr.mxu0 0.0
    %1325 = vmatpush1.msra.mxu0 0.0
    %1326 = vmatprep.subr.mxu0 0.0
    %1327 = vmatpush1.msra.mxu0 0.0
    %1328 = vmatprep.subr.mxu0 0.0
    %1329 = vmatpush1.msra.mxu0 0.0
    %1330 = vmatprep.subr.mxu0 0.0
    %1331 = vmatpush1.msra.mxu0 0.0
    %1332 = vmatprep.subr.mxu0 0.0
    %1333 = vmatpush1.msra.mxu0 0.0
    %1334 = vmatprep.subr.mxu0 0.0
    %1335 = vmatpush1.msra.mxu0 0.0
    %1336 = vmatprep.subr.mxu0 0.0
    %1337 = vmatpush1.msra.mxu0 0.0
    %1338 = vmatprep.subr.mxu0 0.0
    %1339 = vmatpush1.msra.mxu0 0.0
    %1340 = vmatprep.subr.mxu0 0.0
    %1341 = vmatpush1.msra.mxu0 0.0
    %1342 = vmatprep.subr.mxu0 0.0
    %1343 = vmatpush1.msra.mxu0 0.0
    %1344 = vmatprep.subr.mxu0 0.0
    %1345 = vmatpush1.msra.mxu0 0.0
    %1346 = vmatprep.subr.mxu0 0.0
    %1347 = vmatpush1.msra.mxu0 0.0
    %1348 = vmatprep.subr.mxu0 0.0
    %1349 = vmatpush1.msra.mxu0 0.0
    %1350 = vmatprep.subr.mxu0 0.0
    %1351 = vmatpush1.msra.mxu0 0.0
    %1352 = vmatprep.subr.mxu0 0.0
    %1353 = vmatpush1.msra.mxu0 0.0
    %1354 = vmatprep.subr.mxu0 0.0
    %1355 = vmatpush1.msra.mxu0 0.0
    %1356 = vmatprep.subr.mxu0 0.0
    %1357 = vmatpush1.msra.mxu0 0.0
    %1358 = vmatprep.subr.mxu0 0.0
    %1359 = vmatpush1.msra.mxu0 0.0
    %1360 = vmatprep.subr.mxu0 0.0
    %1361 = vmatpush1.msra.mxu0 0.0
    %1362 = vmatprep.subr.mxu0 0.0
    %1363 = vmatpush1.msra.mxu0 0.0
    %1364 = vmatprep.subr.mxu0 0.0
    %1365 = vmatpush1.msra.mxu0 0.0
    %1366 = vmatprep.subr.mxu0 0.0
    %1367 = vmatpush1.msra.mxu0 0.0
    %1368 = vmatprep.subr.mxu0 0.0
    %1369 = vmatpush1.msra.mxu0 0.0
    %1370 = vmatprep.subr.mxu0 0.0
    %1371 = vmatpush1.msra.mxu0 0.0
    %1372 = vmatprep.mubr.f32.mxu0 0.0
    %1373 = vmatmul.mubr.f32.gmra.mrb[0].mxu0 %v1306
    %v1374 = vpop.f32.mrb[0].mxu0
    %v1375 = vadd.f32 %v161, %v1374
    %v1376 = vpop.f32.mrb[0].mxu0
    %1377 = vdwg.mxu0
    %v1378 = vmax.f32 %v1375, 0.0
    %v1380 = vlaneseq
    %v1381 = vshrl.u32 %v1380, 7
    %v1382 = vsub.s32 0, %v1381
    %v1383 = vrot.slane %v51, %v1382
    %v1385 = vmul.f32 %v237, %v1383
    %v1386 = vmul.f32 %v400, %v1383
    %v1387 = vmul.f32 %v563, %v1383
    %v1388 = vmul.f32 %v726, %v1383
    %v1389 = vmul.f32 %v889, %v1383
    %v1390 = vmul.f32 %v1052, %v1383
    %v1391 = vmul.f32 %v1215, %v1383
    %v1392 = vmul.f32 %v1378, %v1383
    %vm1393 = vcmask 254976
    %v1394 = vsel %vm1393, %v1385, 0.0
    %1395 = vadd.xlane.f32.xlu0 %v1394
    %v1396 = vpop.xlane.xlu0 %1395
    %v1397 = vsel %vm1393, %v1386, 0.0
    %1398 = vadd.xlane.f32.xlu0 %v1397
    %v1399 = vpop.xlane.xlu0 %1398
    %v1400 = vsel %vm1393, %v1387, 0.0
    %1401 = vadd.xlane.f32.xlu0 %v1400
    %v1402 = vpop.xlane.xlu0 %1401
    %v1403 = vsel %vm1393, %v1388, 0.0
    %1404 = vadd.xlane.f32.xlu0 %v1403
    %v1405 = vpop.xlane.xlu0 %1404
    %v1406 = vsel %vm1393, %v1389, 0.0
    %1407 = vadd.xlane.f32.xlu0 %v1406
    %v1408 = vpop.xlane.xlu0 %1407
    %v1409 = vsel %vm1393, %v1390, 0.0
    %1410 = vadd.xlane.f32.xlu0 %v1409
    %v1411 = vpop.xlane.xlu0 %1410
    %v1412 = vsel %vm1393, %v1391, 0.0
    %1413 = vadd.xlane.f32.xlu0 %v1412
    %v1414 = vpop.xlane.xlu0 %1413
    %v1415 = vsel %vm1393, %v1392, 0.0
    %1416 = vadd.xlane.f32.xlu0 %v1415
    %v1417 = vpop.xlane.xlu0 %1416
    %v1418 = vstv %s52
    %v1419 = vadd.f32 %v1396, %v1418
    %v1420 = vadd.f32 %v1399, %v1418
    %v1421 = vadd.f32 %v1402, %v1418
    %v1422 = vadd.f32 %v1405, %v1418
    %v1423 = vadd.f32 %v1408, %v1418
    %v1424 = vadd.f32 %v1411, %v1418
    %v1425 = vadd.f32 %v1414, %v1418
    %v1426 = vadd.f32 %v1417, %v1418
    %v1435 = vlaneseq
    %v1436 = vand.u32 %v1435, 127
    %v1437 = vlaneseq
    %v1438 = vshrl.u32 %v1437, 7
    %v1439 = vsub.s32 %v1436, %v1438
    %v1440 = vrot.slane %v1419, %v1439
    %v1441 = vlaneseq
    %v1442 = vshrl.u32 %v1441, 7
    %v1443 = vsub.s32 %v1436, %v1442
    %v1444 = vrot.slane %v1420, %v1443
    %v1445 = vlaneseq
    %v1446 = vshrl.u32 %v1445, 7
    %v1447 = vsub.s32 %v1436, %v1446
    %v1448 = vrot.slane %v1421, %v1447
    %v1449 = vlaneseq
    %v1450 = vshrl.u32 %v1449, 7
    %v1451 = vsub.s32 %v1436, %v1450
    %v1452 = vrot.slane %v1422, %v1451
    %v1453 = vlaneseq
    %v1454 = vshrl.u32 %v1453, 7
    %v1455 = vsub.s32 %v1436, %v1454
    %v1456 = vrot.slane %v1423, %v1455
    %v1457 = vlaneseq
    %v1458 = vshrl.u32 %v1457, 7
    %v1459 = vsub.s32 %v1436, %v1458
    %v1460 = vrot.slane %v1424, %v1459
    %v1461 = vlaneseq
    %v1462 = vshrl.u32 %v1461, 7
    %v1463 = vsub.s32 %v1436, %v1462
    %v1464 = vrot.slane %v1425, %v1463
    %v1465 = vlaneseq
    %v1466 = vshrl.u32 %v1465, 7
    %v1467 = vsub.s32 %v1436, %v1466
    %v1468 = vrot.slane %v1426, %v1467
    %vm1469 = vcmask 1041409
    %v1470 = vsel %vm1469, %v1444, %v1440
    %vm1471 = vcmask 1042434
    %v1472 = vsel %vm1471, %v1448, %v1470
    %vm1473 = vcmask 1043459
    %v1474 = vsel %vm1473, %v1452, %v1472
    %vm1475 = vcmask 1044484
    %v1476 = vsel %vm1475, %v1456, %v1474
    %vm1477 = vcmask 1045509
    %v1478 = vsel %vm1477, %v1460, %v1476
    %vm1479 = vcmask 1046534
    %v1480 = vsel %vm1479, %v1464, %v1478
    %vm1481 = vcmask 1047559
    %v1482 = vsel %vm1481, %v1468, %v1480
    %vm1484 = vcmask 15360
    %1485 = vst.msk [vmem:[%s9] sm:$0xff] %vm1484, %v1482
    %1486 = vst.msk [vmem:[#allocation3] sm:$0x3] %vm1393, %v1299
    %s1487 = scalar_lea.vmem [#allocation3], 2
    %1488 = vst.msk [vmem:[%s1487] sm:$0x3] %vm1393, %v1378
    // Predicated region
    $region38: #{tpu_custom_call.1} parent=1 // pred_check
      _
    $region39: #{tpu_custom_call.1} parent=1 // pred_check_branch
      %1490 = sbr.rel (0) target = $region41
    $region40: #{tpu_custom_call.1} parent=1 // pred_region
      _
    $region41: #{tpu_custom_call.1} parent=1 // pred_fallthru
      _
    // Predicated region
    $region42: #{tpu_custom_call.1} parent=1 // pred_check
      _
    $region43: #{tpu_custom_call.1} parent=1 // pred_check_branch
      %1492 = sbr.rel (0) target = $region45
    $region44: #{tpu_custom_call.1} parent=1 // pred_region
      %s1494 = ssub.s32 64, 64
      %1495 = vsyncadd [#allocation4], %s1494
      %s1496 = sshll.u32 [#allocation3], 4
      %s1497 = int_to_ptr.vmem [resolvable:$true] %s1496
      %1502 = dma.vmem_to_hbm [thread:$0]  %s1497, 64, %s10, [#allocation4], 32, 32, 2
    $region45: #{tpu_custom_call.1} parent=1 // pred_fallthru
      _
    // Predicated region
    $region46: #{tpu_custom_call.1} parent=1 // pred_check
      _
    $region47: #{tpu_custom_call.1} parent=1 // pred_check_branch
      %1504 = sbr.rel (0) target = $region49
    $region48: #{tpu_custom_call.1} parent=1 // pred_region
      _
    $region49: #{tpu_custom_call.1} parent=1 // pred_fallthru
      _
    // Predicated region
    $region50: #{tpu_custom_call.1} parent=1 // pred_check
      _
    $region51: #{tpu_custom_call.1} parent=1 // pred_check_branch
      %1506 = sbr.rel (0) target = $region53
    $region52: #{tpu_custom_call.1} parent=1 // pred_region
      %1507 = dma.done [#allocation4], 64
    $region53: #{tpu_custom_call.1} parent=1 // pred_fallthru
      _
    %1508 = vsyncpa [#allocation4], 1

</llo_original>
